<compile_context>
chip_gen: v7x
topology: tpu7x:2x2x1
jax: 0.10.0
libtpu: 0.0.40
codegen_flags: <defaults>
</compile_context>

<pallas_src>
import functools

import jax
import jax.numpy as jnp
from jax import lax
from jax.experimental import pallas as pl
from jax.experimental.pallas import tpu as pltpu


def bilinear_matrix(out_size: int, in_size: int) -> jnp.ndarray:
    """1-D interpolation matrix A (out_size, in_size) matching
    PyTorch nn.Upsample(mode='bilinear', align_corners=False):
    half-pixel centers, negative source coordinates clamped to 0."""
    scale = in_size / out_size
    dst = jnp.arange(out_size, dtype=jnp.float32)
    src = jnp.maximum((dst + 0.5) * scale - 0.5, 0.0)
    i0 = jnp.clip(jnp.floor(src).astype(jnp.int32), 0, in_size - 1)
    i1 = jnp.minimum(i0 + 1, in_size - 1)
    frac = src - i0.astype(jnp.float32)
    rows = jnp.arange(out_size)
    a = jnp.zeros((out_size, in_size), jnp.float32)
    a = a.at[rows, i0].add(1.0 - frac)
    a = a.at[rows, i1].add(frac)
    return a


def _upsample_conv_bn_relu_kernel(x_ref, aw_ref, bm_ref, cm_ref, ered_ref,
                                  eexp_ref, g_ref, bt_ref, o_ref,
                                  acc_all, sum_f, ssq_f, scale_f, shift_f,
                                  *, eps: float, count: int, tb: int, w2: int):
    """Grid = (phase, image-block of TB images).
    phase 0: upsample + conv for TB images -> VMEM scratch, accumulate BN stats.
    phase 1: (blk 0) finalize BN into scale/shift scratch; then FMA+ReLU+store."""
    phase = pl.program_id(0)
    blk = pl.program_id(1)
    wp = w2 + 2                                  # per-image padded W2 rows

    @pl.when(jnp.logical_and(phase == 0, blk == 0))
    def _init():
        sum_f[...] = jnp.zeros_like(sum_f)
        ssq_f[...] = jnp.zeros_like(ssq_f)

    @pl.when(phase == 0)
    def _conv_and_stats():
        # H-direction x2 bilinear + conv H-pad, acting on the lane-folded (H,Cin)
        # axis: (TB*W, H*Cin) @ (H*Cin, RZ).  (Reordered: smaller-output K=H*Cin
        # pass first -> fewer total MXU FLOPs than aw-first.)
        t0 = jnp.dot(x_ref[...], bm_ref[...],
                     preferred_element_type=jnp.float32)        # (TB*W, RZ)
        # W-direction x2 bilinear + conv W-pad per image via a block-diagonal
        # matrix on the sublane axis (one matmul for all TB images).
        z = jnp.dot(aw_ref[...], t0,
                    preferred_element_type=jnp.float32)         # (TB*(W2+2), RZ)

        # 3x3 conv (stride 1, pad 1) as ONE matmul with block-Toeplitz weights:
        # per image, concat the 3 dw-shifted row windows along lanes (K = 3*RZ),
        # then stack the TB images along sublanes.
        # (Measure-and-pick alternative: 3 accumulating K=RZ dots w/o the concat.)
        parts = []
        for t in range(tb):
            zt = z[t * wp:(t + 1) * wp]
            parts.append(jnp.concatenate(
                [zt[0:w2], zt[1:w2 + 1], zt[2:w2 + 2]], axis=1))
        zcat = jnp.concatenate(parts, axis=0)                   # (TB*W2, 3*RZ)
        acc = jnp.dot(zcat, cm_ref[...],
                      preferred_element_type=jnp.float32)       # (TB*W2, H2*Cout)
        # Conv bias omitted: train-mode BatchNorm subtracts the batch mean, so a
        # per-channel constant added before BN cancels exactly.

        row0 = pl.multiple_of(blk * (tb * w2), tb * w2)
        acc_all[pl.ds(row0, tb * w2), :] = acc                  # no phase-1 recompute
        sum_f[...] += jnp.sum(acc, axis=0, keepdims=True)       # (1, H2*Cout)
        ssq_f[...] += jnp.sum(acc * acc, axis=0, keepdims=True)

    @pl.when(jnp.logical_and(phase == 1, blk == 0))
    def _finalize_bn():
        # Hoisted out of the per-block path: runs exactly once.
        inv_n = jnp.float32(1.0 / count)
        s1 = jnp.dot(sum_f[...], ered_ref[...],
                     preferred_element_type=jnp.float32)        # (1, Cout)
        s2 = jnp.dot(ssq_f[...], ered_ref[...],
                     preferred_element_type=jnp.float32)        # (1, Cout)
        mean = s1 * inv_n
        # E[x^2] - E[x]^2 in f32: fine at these magnitudes / tolerance; switch to
        # a mean-subtracted second pass only if tolerances tighten.
        var = s2 * inv_n - mean * mean
        sc = g_ref[...] * lax.rsqrt(var + eps)                  # (1, Cout)
        sh = bt_ref[...] - mean * sc                            # (1, Cout)
        scale_f[...] = jnp.dot(sc, eexp_ref[...],
                               preferred_element_type=jnp.float32)  # (1, H2*Cout)
        shift_f[...] = jnp.dot(sh, eexp_ref[...],
                               preferred_element_type=jnp.float32)

    @pl.when(phase == 1)
    def _write():
        row0 = pl.multiple_of(blk * (tb * w2), tb * w2)
        a = acc_all[pl.ds(row0, tb * w2), :]
        o_ref[...] = jnp.maximum(a * scale_f[...] + shift_f[...], 0.0)


def upsample_forward(x_nchw, w_oihw, bias, gamma, beta, eps=1e-5):
    """Full Upsample.forward as one Pallas kernel with a (phase, batch-block) grid."""
    n, cin, h, w = x_nchw.shape
    cout = w_oihw.shape[0]
    h2, w2 = 2 * h, 2 * w
    rz = (h2 + 2) * cin                     # lane width of padded, folded (H2, Cin)

    # Conv bias is dropped on purpose: with train-mode BatchNorm (batch stats)
    # a per-channel constant added before BN cancels exactly.
    del bias

    # Images per grid step: largest divisor of n with tb*w <= 128 (keeps the
    # block-diagonal W-upsample matmul inside one MXU K pass) and tb <= 8.
    cap = max(1, min(8, max(1, 128 // max(w, 1)), n))
    tb = 1
    for d in range(cap, 0, -1):
        if n % d == 0:
            tb = d
            break
    nb = n // tb

    # Input as (N*W, H*Cin): W on the sublane axis, (H, Cin) folded on lanes.
    # f32 kept: bf16 operands would halve DMA/MXU but risk the 1e-3 tolerance.
    # (Wrapper transposes are extra HBM passes; drop them if neighbors can
    #  consume the folded layout directly.)
    x_t = (jnp.transpose(x_nchw, (0, 3, 2, 1)).astype(jnp.float32)
           .reshape(n * w, h * cin))

    # W-direction x2 bilinear + conv zero-pad, block-diagonal over TB images.
    aw_pad = jnp.zeros((w2 + 2, w), jnp.float32).at[1:-1].set(bilinear_matrix(w2, w))
    aw_blk = jnp.kron(jnp.eye(tb, dtype=jnp.float32), aw_pad)   # (TB*(W2+2), TB*W)

    # H-direction x2 bilinear + conv zero-pad on the folded (H*Cin) lanes:
    #   B[h*Cin + c, p*Cin + c'] = ah_pad[p, h] * delta(c, c')
    ah_pad = jnp.zeros((h2 + 2, h), jnp.float32).at[1:-1].set(bilinear_matrix(h2, h))
    bmat = jnp.einsum('ph,cd->hcpd', ah_pad, jnp.eye(cin, dtype=jnp.float32))
    bmat = bmat.reshape(h * cin, rz)

    # 3x3 conv as a single matmul: block-Toeplitz weights
    #   C[dw*RZ + p*Cin + c, i*Cout + co] = Wconv[co, c, p - i, dw]  (0 <= p-i <= 2)
    p_idx = jnp.arange(h2 + 2)[:, None]
    i_idx = jnp.arange(h2)[None, :]
    dh_onehot = ((p_idx - i_idx)[None] ==
                 jnp.arange(3)[:, None, None]).astype(jnp.float32)   # (3, H2+2, H2)
    wk = jnp.transpose(w_oihw, (2, 3, 1, 0)).astype(jnp.float32)     # (dh, dw, Cin, Cout)
    cmat = jnp.einsum('api,adco->dpcio', dh_onehot, wk)
    cmat = cmat.reshape(3 * rz, h2 * cout)

    # fold/unfold helpers between per-channel (1, Cout) and lane-folded (1, H2*Cout)
    e_red = jnp.tile(jnp.eye(cout, dtype=jnp.float32), (h2, 1))      # (H2*Cout, Cout)
    e_exp = jnp.tile(jnp.eye(cout, dtype=jnp.float32), (1, h2))      # (Cout, H2*Cout)

    # --- VMEM budget guard (whole-batch acc scratch + resident constants) -------
    acc_bytes = n * w2 * h2 * cout * 4
    const_bytes = int(aw_blk.size + bmat.size + cmat.size +
                      e_red.size + e_exp.size) * 4
    step_bytes = (acc_bytes + 2 * const_bytes +
                  2 * (tb * w * h * cin + tb * w2 * h2 * cout) * 4)
    assert step_bytes < 24 * 1024 * 1024, (
        "VMEM budget exceeded at this shape; needs lane-tiled cmat / HBM acc path")
    # TODO(synk): lane-tiled conv matmul + HBM-resident acc path for large shapes
    # (v7x has only 64 MiB VMEM; cmat scales as ~12*H^2*Cin*Cout*4 B).

    kernel = functools.partial(_upsample_conv_bn_relu_kernel,
                               eps=float(eps), count=n * h2 * w2, tb=tb, w2=w2)

    cost = pl.CostEstimate(
        flops=2 * n * (w * (h * cin) * rz
                       + (w2 + 2) * (tb * w) * rz
                       + w2 * (3 * rz) * (h2 * cout)),
        transcendentals=cout,
        bytes_accessed=int(x_t.size) * 4 + n * w2 * h2 * cout * 4 + const_bytes,
    )

    out2d = pl.pallas_call(
        kernel,
        out_shape=jax.ShapeDtypeStruct((n * w2, h2 * cout), jnp.float32),
        grid_spec=pltpu.PrefetchScalarGridSpec(
            num_scalar_prefetch=0,
            grid=(2, nb),                        # (phase, image block)
            in_specs=[
                # x: block b in phase 0; pinned to the last-touched block in
                # phase 1 so the BN/ReLU epilogue issues NO extra input DMAs.
                pl.BlockSpec((tb * w, h * cin),
                             lambda p, b: (b * (1 - p) + (nb - 1) * p, 0)),
                pl.BlockSpec((tb * (w2 + 2), tb * w), lambda p, b: (0, 0)),
                pl.BlockSpec((h * cin, rz), lambda p, b: (0, 0)),
                pl.BlockSpec((3 * rz, h2 * cout), lambda p, b: (0, 0)),
                pl.BlockSpec((h2 * cout, cout), lambda p, b: (0, 0)),
                pl.BlockSpec((cout, h2 * cout), lambda p, b: (0, 0)),
                pl.BlockSpec((1, cout), lambda p, b: (0, 0)),
                pl.BlockSpec((1, cout), lambda p, b: (0, 0)),
            ],
            # Invariant (documented, relied upon): phase 0 never stores to o_ref;
            # its out index is pinned to block 0, which stays VMEM-resident
            # (never written back) until phase1/blk0 overwrites it.  Grid order
            # is phase-major, block-minor, both axes sequential.
            out_specs=pl.BlockSpec((tb * w2, h2 * cout), lambda p, b: (b * p, 0)),
            scratch_shapes=[
                pltpu.VMEM((n * w2, h2 * cout), jnp.float32),   # acc_all (whole batch)
                pltpu.VMEM((1, h2 * cout), jnp.float32),        # BN sum (lane-folded)
                pltpu.VMEM((1, h2 * cout), jnp.float32),        # BN sum of squares
                pltpu.VMEM((1, h2 * cout), jnp.float32),        # folded scale
                pltpu.VMEM((1, h2 * cout), jnp.float32),        # folded shift
            ],
        ),
        compiler_params=pltpu.CompilerParams(
            # Both axes sequential: phase 0 carries the shared BN-stat scratch
            # across the batch axis.
            # TODO(synk): v7x megacore split (per-core partial sums reduced
            # through CMEM / a second pallas_call) so the batch axis can be
            # 'parallel' and the second TensorCore is used.
            dimension_semantics=("arbitrary", "arbitrary"),
            vmem_limit_bytes=32 * 1024 * 1024,
        ),
        cost_estimate=cost,
    )(x_t, aw_blk, bmat, cmat, e_red, e_exp,
      gamma.reshape(1, cout).astype(jnp.float32),
      beta.reshape(1, cout).astype(jnp.float32))

    # (N*W2, H2*Cout) -> (N, W2, H2, Cout) -> NCHW  (pure wrapper-side plumbing)
    out = out2d.reshape(n, w2, h2, cout)
    return jnp.transpose(out, (0, 3, 2, 1))
    # TODO(synk): BatchNorm2d running_mean/running_var updates (training-mode
    # module-state side effect) are not emitted; the dropped conv bias would
    # have to be re-added to the mean used for any running-stat update.


def upsample_forward_reference(x_nchw, w_oihw, bias, gamma, beta, eps=1e-5):
    """Plain-JAX reference for validation."""
    n, cin, h, w = x_nchw.shape
    ah = bilinear_matrix(2 * h, h)
    aw = bilinear_matrix(2 * w, w)
    xu = jnp.einsum('ph,nchw->ncpw', ah, x_nchw, precision=lax.Precision.HIGHEST)
    xu = jnp.einsum('qw,ncpw->ncpq', aw, xu, precision=lax.Precision.HIGHEST)
    y = lax.conv_general_dilated(xu, w_oihw, window_strides=(1, 1),
                                 padding=((1, 1), (1, 1)),
                                 dimension_numbers=('NCHW', 'OIHW', 'NCHW'),
                                 precision=lax.Precision.HIGHEST)
    y = y + bias[None, :, None, None]
    mean = y.mean(axis=(0, 2, 3), keepdims=True)
    var = ((y - mean) ** 2).mean(axis=(0, 2, 3), keepdims=True)
    y = (y - mean) * lax.rsqrt(var + eps) * gamma[None, :, None, None] \
        + beta[None, :, None, None]
    return jnp.maximum(y, 0.0)


if __name__ == "__main__":
    key = jax.random.PRNGKey(0)
    kx, kw, kb, kg, kbt = jax.random.split(key, 5)

    inchn, outchn = 4, 8
    x = jax.random.normal(kx, (2, inchn, 16, 16), jnp.float32)          # NCHW
    w_conv = 0.1 * jax.random.normal(kw, (outchn, inchn, 3, 3), jnp.float32)
    b_conv = 0.1 * jax.random.normal(kb, (outchn,), jnp.float32)
    gamma = 1.0 + 0.1 * jax.random.normal(kg, (outchn,), jnp.float32)
    beta = 0.1 * jax.random.normal(kbt, (outchn,), jnp.float32)

    out = jax.block_until_ready(upsample_forward(x, w_conv, b_conv, gamma, beta))
    ref = jax.block_until_ready(
        upsample_forward_reference(x, w_conv, b_conv, gamma, beta))

    assert out.shape == (2, outchn, 32, 32), out.shape
    max_err = float(jnp.max(jnp.abs(out - ref)))
    assert jnp.allclose(out, ref, atol=1e-3, rtol=1e-3), max_err
    print("KERNEL_OK")
</pallas_src>

<mosaic_0001>
module attributes {stable_mosaic.version = 11 : i64} {
  func.func @_upsample_conv_bn_relu_kernel(%arg0: i32, %arg1: i32, %arg2: memref<32x64xf32, #tpu.memory_space<vmem>>, %arg3: memref<68x32xf32, #tpu.memory_space<vmem>>, %arg4: memref<64x136xf32, #tpu.memory_space<vmem>>, %arg5: memref<408x256xf32, #tpu.memory_space<vmem>>, %arg6: memref<256x8xf32, #tpu.memory_space<vmem>>, %arg7: memref<8x256xf32, #tpu.memory_space<vmem>>, %arg8: memref<1x8xf32, #tpu.memory_space<vmem>>, %arg9: memref<1x8xf32, #tpu.memory_space<vmem>>, %arg10: memref<64x256xf32, #tpu.memory_space<vmem>>, %arg11: memref<64x256xf32, #tpu.memory_space<vmem>>, %arg12: memref<1x256xf32, #tpu.memory_space<vmem>>, %arg13: memref<1x256xf32, #tpu.memory_space<vmem>>, %arg14: memref<1x256xf32, #tpu.memory_space<vmem>>, %arg15: memref<1x256xf32, #tpu.memory_space<vmem>>) attributes {dimension_semantics = [#tpu.dimension_semantics<arbitrary>, #tpu.dimension_semantics<arbitrary>], iteration_bounds = array<i64: 2, 1>, scalar_prefetch = 0 : i64, scratch_operands = 5 : i64, tpu.core_type = #tpu.core_type<tc>, window_params = [{transform_indices = @transform_0, window_bounds = array<i64: 32, 64>}, {pipeline_mode = #tpu.pipeline_mode<synchronous>, transform_indices = @transform_1, window_bounds = array<i64: 68, 32>}, {pipeline_mode = #tpu.pipeline_mode<synchronous>, transform_indices = @transform_2, window_bounds = array<i64: 64, 136>}, {pipeline_mode = #tpu.pipeline_mode<synchronous>, transform_indices = @transform_3, window_bounds = array<i64: 408, 256>}, {pipeline_mode = #tpu.pipeline_mode<synchronous>, transform_indices = @transform_4, window_bounds = array<i64: 256, 8>}, {pipeline_mode = #tpu.pipeline_mode<synchronous>, transform_indices = @transform_5, window_bounds = array<i64: 8, 256>}, {pipeline_mode = #tpu.pipeline_mode<synchronous>, transform_indices = @transform_6, window_bounds = array<i64: 1, 8>}, {pipeline_mode = #tpu.pipeline_mode<synchronous>, transform_indices = @transform_7, window_bounds = array<i64: 1, 8>}, {transform_indices = @transform_8, window_bounds = array<i64: 64, 256>}]} {
    %c0_i32 = arith.constant 0 : i32
    %0 = arith.cmpi eq, %arg0, %c0_i32 : i32
    %c0_i32_0 = arith.constant 0 : i32
    %1 = arith.cmpi eq, %arg1, %c0_i32_0 : i32
    %2 = arith.andi %0, %1 : i1
    %3 = arith.extui %2 : i1 to i32
    %c0_i32_1 = arith.constant 0 : i32
    %4 = arith.cmpi ne, %3, %c0_i32_1 : i32
    scf.if %4 {
      %cst = arith.constant 0.000000e+00 : f32
      %16 = vector.broadcast %cst : f32 to vector<1x256xf32>
      %c0 = arith.constant 0 : index
      %c0_8 = arith.constant 0 : index
      %17 = vector.load %arg12[%c0, %c0_8] : memref<1x256xf32, #tpu.memory_space<vmem>>, vector<1x256xf32>
      tpu.vector_store %arg12[%c0, %c0_8], %16 {strides = array<i32>} : memref<1x256xf32, #tpu.memory_space<vmem>>, vector<1x256xf32>,
      %cst_9 = arith.constant 0.000000e+00 : f32
      %18 = vector.broadcast %cst_9 : f32 to vector<1x256xf32>
      %c0_10 = arith.constant 0 : index
      %c0_11 = arith.constant 0 : index
      %19 = vector.load %arg13[%c0_10, %c0_11] : memref<1x256xf32, #tpu.memory_space<vmem>>, vector<1x256xf32>
      tpu.vector_store %arg13[%c0_10, %c0_11], %18 {strides = array<i32>} : memref<1x256xf32, #tpu.memory_space<vmem>>, vector<1x256xf32>,
    } else {
    }
    %c0_i32_2 = arith.constant 0 : i32
    %5 = arith.cmpi eq, %arg0, %c0_i32_2 : i32
    %6 = arith.extui %5 : i1 to i32
    %c0_i32_3 = arith.constant 0 : i32
    %7 = arith.cmpi ne, %6, %c0_i32_3 : i32
    scf.if %7 {
      %c0 = arith.constant 0 : index
      %c0_8 = arith.constant 0 : index
      %16 = vector.load %arg2[%c0, %c0_8] : memref<32x64xf32, #tpu.memory_space<vmem>>, vector<32x64xf32>
      %c0_9 = arith.constant 0 : index
      %c0_10 = arith.constant 0 : index
      %17 = vector.load %arg4[%c0_9, %c0_10] : memref<64x136xf32, #tpu.memory_space<vmem>>, vector<64x136xf32>
      %cst = arith.constant dense<0.000000e+00> : vector<32x136xf32>
      %18 = tpu.matmul %16, %17, %cst {dimension_numbers = #tpu.dot_dimension_numbers<[1], [0], [0], [1], [0, 0, 1, 1], [], []>} : vector<32x64xf32>, vector<64x136xf32>, vector<32x136xf32> -> vector<32x136xf32>
      %c0_11 = arith.constant 0 : index
      %c0_12 = arith.constant 0 : index
      %19 = vector.load %arg3[%c0_11, %c0_12] : memref<68x32xf32, #tpu.memory_space<vmem>>, vector<68x32xf32>
      %cst_13 = arith.constant dense<0.000000e+00> : vector<68x136xf32>
      %20 = tpu.matmul %19, %18, %cst_13 {dimension_numbers = #tpu.dot_dimension_numbers<[1], [0], [0], [1], [0, 0, 1, 1], [], []>} : vector<68x32xf32>, vector<32x136xf32>, vector<68x136xf32> -> vector<68x136xf32>
      %21 = vector.extract_strided_slice %20 {offsets = [0, 0], sizes = [34, 136], strides = [1, 1]} : vector<68x136xf32> to vector<34x136xf32>
      %22 = vector.extract_strided_slice %21 {offsets = [0, 0], sizes = [32, 136], strides = [1, 1]} : vector<34x136xf32> to vector<32x136xf32>
      %23 = vector.extract_strided_slice %21 {offsets = [1, 0], sizes = [32, 136], strides = [1, 1]} : vector<34x136xf32> to vector<32x136xf32>
      %24 = vector.extract_strided_slice %21 {offsets = [2, 0], sizes = [32, 136], strides = [1, 1]} : vector<34x136xf32> to vector<32x136xf32>
      %25 = tpu.concatenate %22, %23, %24 in 1 : vector<32x136xf32>, vector<32x136xf32>, vector<32x136xf32> -> vector<32x408xf32>
      %26 = vector.extract_strided_slice %20 {offsets = [34, 0], sizes = [34, 136], strides = [1, 1]} : vector<68x136xf32> to vector<34x136xf32>
      %27 = vector.extract_strided_slice %26 {offsets = [0, 0], sizes = [32, 136], strides = [1, 1]} : vector<34x136xf32> to vector<32x136xf32>
      %28 = vector.extract_strided_slice %26 {offsets = [1, 0], sizes = [32, 136], strides = [1, 1]} : vector<34x136xf32> to vector<32x136xf32>
      %29 = vector.extract_strided_slice %26 {offsets = [2, 0], sizes = [32, 136], strides = [1, 1]} : vector<34x136xf32> to vector<32x136xf32>
      %30 = tpu.concatenate %27, %28, %29 in 1 : vector<32x136xf32>, vector<32x136xf32>, vector<32x136xf32> -> vector<32x408xf32>
      %31 = tpu.concatenate %25, %30 in 0 : vector<32x408xf32>, vector<32x408xf32> -> vector<64x408xf32>
      %c0_14 = arith.constant 0 : index
      %c0_15 = arith.constant 0 : index
      %32 = vector.load %arg5[%c0_14, %c0_15] : memref<408x256xf32, #tpu.memory_space<vmem>>, vector<408x256xf32>
      %cst_16 = arith.constant dense<0.000000e+00> : vector<64x256xf32>
      %33 = tpu.matmul %31, %32, %cst_16 {dimension_numbers = #tpu.dot_dimension_numbers<[1], [0], [0], [1], [0, 0, 1, 1], [], []>} : vector<64x408xf32>, vector<408x256xf32>, vector<64x256xf32> -> vector<64x256xf32>
      %c64_i32 = arith.constant 64 : i32
      %34 = arith.muli %arg1, %c64_i32 : i32
      %35 = tpu.assume_multiple %34, 64 : i32
      %36 = arith.index_cast %35 : i32 to index
      %c0_17 = arith.constant 0 : index
      %37 = vector.load %arg11[%36, %c0_17] : memref<64x256xf32, #tpu.memory_space<vmem>>, vector<64x256xf32>
      tpu.vector_store %arg11[%36, %c0_17], %33 {strides = array<i32>} : memref<64x256xf32, #tpu.memory_space<vmem>>, vector<64x256xf32>,
      %c0_18 = arith.constant 0 : index
      %c0_19 = arith.constant 0 : index
      %38 = vector.load %arg12[%c0_18, %c0_19] : memref<1x256xf32, #tpu.memory_space<vmem>>, vector<1x256xf32>
      %cst_20 = arith.constant dense<0.000000e+00> : vector<256xf32>
      %39 = vector.multi_reduction <add>, %33, %cst_20 [0] : vector<64x256xf32> to vector<256xf32>
      %40 = vector.shape_cast %39 : vector<256xf32> to vector<1x256xf32>
      %41 = arith.addf %38, %40 : vector<1x256xf32>
      %c0_21 = arith.constant 0 : index
      %c0_22 = arith.constant 0 : index
      %42 = vector.load %arg12[%c0_21, %c0_22] : memref<1x256xf32, #tpu.memory_space<vmem>>, vector<1x256xf32>
      tpu.vector_store %arg12[%c0_21, %c0_22], %41 {strides = array<i32>} : memref<1x256xf32, #tpu.memory_space<vmem>>, vector<1x256xf32>,
      %c0_23 = arith.constant 0 : index
      %c0_24 = arith.constant 0 : index
      %43 = vector.load %arg13[%c0_23, %c0_24] : memref<1x256xf32, #tpu.memory_space<vmem>>, vector<1x256xf32>
      %44 = arith.mulf %33, %33 : vector<64x256xf32>
      %cst_25 = arith.constant dense<0.000000e+00> : vector<256xf32>
      %45 = vector.multi_reduction <add>, %44, %cst_25 [0] : vector<64x256xf32> to vector<256xf32>
      %46 = vector.shape_cast %45 : vector<256xf32> to vector<1x256xf32>
      %47 = arith.addf %43, %46 : vector<1x256xf32>
      %c0_26 = arith.constant 0 : index
      %c0_27 = arith.constant 0 : index
      %48 = vector.load %arg13[%c0_26, %c0_27] : memref<1x256xf32, #tpu.memory_space<vmem>>, vector<1x256xf32>
      tpu.vector_store %arg13[%c0_26, %c0_27], %47 {strides = array<i32>} : memref<1x256xf32, #tpu.memory_space<vmem>>, vector<1x256xf32>,
    } else {
    }
    %c1_i32 = arith.constant 1 : i32
    %8 = arith.cmpi eq, %arg0, %c1_i32 : i32
    %c0_i32_4 = arith.constant 0 : i32
    %9 = arith.cmpi eq, %arg1, %c0_i32_4 : i32
    %10 = arith.andi %8, %9 : i1
    %11 = arith.extui %10 : i1 to i32
    %c0_i32_5 = arith.constant 0 : i32
    %12 = arith.cmpi ne, %11, %c0_i32_5 : i32
    scf.if %12 {
      %c0 = arith.constant 0 : index
      %c0_8 = arith.constant 0 : index
      %16 = vector.load %arg12[%c0, %c0_8] : memref<1x256xf32, #tpu.memory_space<vmem>>, vector<1x256xf32>
      %c0_9 = arith.constant 0 : index
      %c0_10 = arith.constant 0 : index
      %17 = vector.load %arg6[%c0_9, %c0_10] : memref<256x8xf32, #tpu.memory_space<vmem>>, vector<256x8xf32>
      %cst = arith.constant dense<0.000000e+00> : vector<1x8xf32>
      %18 = tpu.matmul %16, %17, %cst {dimension_numbers = #tpu.dot_dimension_numbers<[1], [0], [0], [1], [0, 0, 1, 1], [], []>} : vector<1x256xf32>, vector<256x8xf32>, vector<1x8xf32> -> vector<1x8xf32>
      %c0_11 = arith.constant 0 : index
      %c0_12 = arith.constant 0 : index
      %19 = vector.load %arg13[%c0_11, %c0_12] : memref<1x256xf32, #tpu.memory_space<vmem>>, vector<1x256xf32>
      %c0_13 = arith.constant 0 : index
      %c0_14 = arith.constant 0 : index
      %20 = vector.load %arg6[%c0_13, %c0_14] : memref<256x8xf32, #tpu.memory_space<vmem>>, vector<256x8xf32>
      %cst_15 = arith.constant dense<0.000000e+00> : vector<1x8xf32>
      %21 = tpu.matmul %19, %20, %cst_15 {dimension_numbers = #tpu.dot_dimension_numbers<[1], [0], [0], [1], [0, 0, 1, 1], [], []>} : vector<1x256xf32>, vector<256x8xf32>, vector<1x8xf32> -> vector<1x8xf32>
      %cst_16 = arith.constant 4.8828125E-4 : f32
      %22 = vector.broadcast %cst_16 : f32 to vector<1x8xf32>
      %23 = arith.mulf %18, %22 : vector<1x8xf32>
      %cst_17 = arith.constant 4.8828125E-4 : f32
      %24 = vector.broadcast %cst_17 : f32 to vector<1x8xf32>
      %25 = arith.mulf %21, %24 : vector<1x8xf32>
      %26 = arith.mulf %23, %23 : vector<1x8xf32>
      %27 = arith.subf %25, %26 : vector<1x8xf32>
      %c0_18 = arith.constant 0 : index
      %c0_19 = arith.constant 0 : index
      %28 = vector.load %arg8[%c0_18, %c0_19] : memref<1x8xf32, #tpu.memory_space<vmem>>, vector<1x8xf32>
      %cst_20 = arith.constant 9.99999974E-6 : f32
      %29 = vector.broadcast %cst_20 : f32 to vector<1x8xf32>
      %30 = arith.addf %27, %29 : vector<1x8xf32>
      %31 = math.rsqrt %30 : vector<1x8xf32>
      %32 = arith.mulf %28, %31 : vector<1x8xf32>
      %c0_21 = arith.constant 0 : index
      %c0_22 = arith.constant 0 : index
      %33 = vector.load %arg9[%c0_21, %c0_22] : memref<1x8xf32, #tpu.memory_space<vmem>>, vector<1x8xf32>
      %34 = arith.mulf %23, %32 : vector<1x8xf32>
      %35 = arith.subf %33, %34 : vector<1x8xf32>
      %c0_23 = arith.constant 0 : index
      %c0_24 = arith.constant 0 : index
      %36 = vector.load %arg7[%c0_23, %c0_24] : memref<8x256xf32, #tpu.memory_space<vmem>>, vector<8x256xf32>
      %cst_25 = arith.constant dense<0.000000e+00> : vector<1x256xf32>
      %37 = tpu.matmul %32, %36, %cst_25 {dimension_numbers = #tpu.dot_dimension_numbers<[1], [0], [0], [1], [0, 0, 1, 1], [], []>} : vector<1x8xf32>, vector<8x256xf32>, vector<1x256xf32> -> vector<1x256xf32>
      %c0_26 = arith.constant 0 : index
      %c0_27 = arith.constant 0 : index
      %38 = vector.load %arg14[%c0_26, %c0_27] : memref<1x256xf32, #tpu.memory_space<vmem>>, vector<1x256xf32>
      tpu.vector_store %arg14[%c0_26, %c0_27], %37 {strides = array<i32>} : memref<1x256xf32, #tpu.memory_space<vmem>>, vector<1x256xf32>,
      %c0_28 = arith.constant 0 : index
      %c0_29 = arith.constant 0 : index
      %39 = vector.load %arg7[%c0_28, %c0_29] : memref<8x256xf32, #tpu.memory_space<vmem>>, vector<8x256xf32>
      %cst_30 = arith.constant dense<0.000000e+00> : vector<1x256xf32>
      %40 = tpu.matmul %35, %39, %cst_30 {dimension_numbers = #tpu.dot_dimension_numbers<[1], [0], [0], [1], [0, 0, 1, 1], [], []>} : vector<1x8xf32>, vector<8x256xf32>, vector<1x256xf32> -> vector<1x256xf32>
      %c0_31 = arith.constant 0 : index
      %c0_32 = arith.constant 0 : index
      %41 = vector.load %arg15[%c0_31, %c0_32] : memref<1x256xf32, #tpu.memory_space<vmem>>, vector<1x256xf32>
      tpu.vector_store %arg15[%c0_31, %c0_32], %40 {strides = array<i32>} : memref<1x256xf32, #tpu.memory_space<vmem>>, vector<1x256xf32>,
    } else {
    }
    %c1_i32_6 = arith.constant 1 : i32
    %13 = arith.cmpi eq, %arg0, %c1_i32_6 : i32
    %14 = arith.extui %13 : i1 to i32
    %c0_i32_7 = arith.constant 0 : i32
    %15 = arith.cmpi ne, %14, %c0_i32_7 : i32
    scf.if %15 {
      %c64_i32 = arith.constant 64 : i32
      %16 = arith.muli %arg1, %c64_i32 : i32
      %17 = tpu.assume_multiple %16, 64 : i32
      %18 = arith.index_cast %17 : i32 to index
      %c0 = arith.constant 0 : index
      %19 = vector.load %arg11[%18, %c0] : memref<64x256xf32, #tpu.memory_space<vmem>>, vector<64x256xf32>
      %c0_8 = arith.constant 0 : index
      %c0_9 = arith.constant 0 : index
      %20 = vector.load %arg14[%c0_8, %c0_9] : memref<1x256xf32, #tpu.memory_space<vmem>>, vector<1x256xf32>
      %21 = vector.broadcast %20 : vector<1x256xf32> to vector<64x256xf32>
      %22 = arith.mulf %19, %21 : vector<64x256xf32>
      %c0_10 = arith.constant 0 : index
      %c0_11 = arith.constant 0 : index
      %23 = vector.load %arg15[%c0_10, %c0_11] : memref<1x256xf32, #tpu.memory_space<vmem>>, vector<1x256xf32>
      %24 = vector.broadcast %23 : vector<1x256xf32> to vector<64x256xf32>
      %25 = arith.addf %22, %24 : vector<64x256xf32>
      %cst = arith.constant 0.000000e+00 : f32
      %26 = vector.broadcast %cst : f32 to vector<64x256xf32>
      %27 = arith.maximumf %25, %26 : vector<64x256xf32>
      %c0_12 = arith.constant 0 : index
      %c0_13 = arith.constant 0 : index
      %28 = vector.load %arg10[%c0_12, %c0_13] : memref<64x256xf32, #tpu.memory_space<vmem>>, vector<64x256xf32>
      tpu.vector_store %arg10[%c0_12, %c0_13], %27 {strides = array<i32>} : memref<64x256xf32, #tpu.memory_space<vmem>>, vector<64x256xf32>,
    } else {
    }
    return
  }
  func.func @transform_0(%arg0: i32, %arg1: i32) -> (i32, i32) {
    %c1_i32 = arith.constant 1 : i32
    %0 = arith.subi %c1_i32, %arg0 : i32
    %1 = arith.muli %arg1, %0 : i32
    %c0_i32 = arith.constant 0 : i32
    %2 = arith.muli %c0_i32, %arg0 : i32
    %3 = arith.addi %1, %2 : i32
    %c0_i32_0 = arith.constant 0 : i32
    %c0_i32_1 = arith.constant 0 : i32
    return %3, %c0_i32_0 : i32, i32
  }
  func.func @transform_1(%arg0: i32, %arg1: i32) -> (i32, i32) {
    %c0_i32 = arith.constant 0 : i32
    %c0_i32_0 = arith.constant 0 : i32
    %c0_i32_1 = arith.constant 0 : i32
    return %c0_i32, %c0_i32_0 : i32, i32
  }
  func.func @transform_2(%arg0: i32, %arg1: i32) -> (i32, i32) {
    %c0_i32 = arith.constant 0 : i32
    %c0_i32_0 = arith.constant 0 : i32
    %c0_i32_1 = arith.constant 0 : i32
    return %c0_i32, %c0_i32_0 : i32, i32
  }
  func.func @transform_3(%arg0: i32, %arg1: i32) -> (i32, i32) {
    %c0_i32 = arith.constant 0 : i32
    %c0_i32_0 = arith.constant 0 : i32
    %c0_i32_1 = arith.constant 0 : i32
    return %c0_i32, %c0_i32_0 : i32, i32
  }
  func.func @transform_4(%arg0: i32, %arg1: i32) -> (i32, i32) {
    %c0_i32 = arith.constant 0 : i32
    %c0_i32_0 = arith.constant 0 : i32
    %c0_i32_1 = arith.constant 0 : i32
    return %c0_i32, %c0_i32_0 : i32, i32
  }
  func.func @transform_5(%arg0: i32, %arg1: i32) -> (i32, i32) {
    %c0_i32 = arith.constant 0 : i32
    %c0_i32_0 = arith.constant 0 : i32
    %c0_i32_1 = arith.constant 0 : i32
    return %c0_i32, %c0_i32_0 : i32, i32
  }
  func.func @transform_6(%arg0: i32, %arg1: i32) -> (i32, i32) {
    %c0_i32 = arith.constant 0 : i32
    %c0_i32_0 = arith.constant 0 : i32
    %c0_i32_1 = arith.constant 0 : i32
    return %c0_i32, %c0_i32_0 : i32, i32
  }
  func.func @transform_7(%arg0: i32, %arg1: i32) -> (i32, i32) {
    %c0_i32 = arith.constant 0 : i32
    %c0_i32_0 = arith.constant 0 : i32
    %c0_i32_1 = arith.constant 0 : i32
    return %c0_i32, %c0_i32_0 : i32, i32
  }
  func.func @transform_8(%arg0: i32, %arg1: i32) -> (i32, i32) {
    %0 = arith.muli %arg1, %arg0 : i32
    %c0_i32 = arith.constant 0 : i32
    %c0_i32_0 = arith.constant 0 : i32
    return %0, %c0_i32 : i32, i32
  }
}

</mosaic_0001>

<llo_original>
// kernel: tpu_custom_call.1
$region0: #{tpu_custom_call.1}
  #allocation0 [shape = 'u32[]', space=smem, size = 0x4, offset = 0x4, fixed_abs, tag = 'smem constant byte address 0x4 - core index']
  #allocation1 [shape = 'u32[144,128]{1,0:T(1,128)}', space=vmem, size = 0x12000, scoped, tag = 'internal scratch']
  #allocation2 [shape = 'f32[64,256]{1,0:T(8,128)}', space=vmem, size = 0x10000, scoped, tag = 'scratch operand']
  #allocation3 [shape = 'f32[1,256]{1,0:T(1,128)}', space=vmem, size = 0x400, scoped, tag = 'scratch operand']
  #allocation4 [shape = 'f32[1,256]{1,0:T(1,128)}', space=vmem, size = 0x400, scoped, tag = 'scratch operand']
  #allocation5 [shape = 'f32[1,256]{1,0:T(1,128)}', space=vmem, size = 0x400, scoped, tag = 'scratch operand']
  #allocation6 [shape = 'f32[1,256]{1,0:T(1,128)}', space=vmem, size = 0x400, scoped, tag = 'scratch operand']
  %s0 = inlined_call_operand.vmem [shape: f32[32,64], index: 0, kind: input, shape index: {}]
  %s1 = inlined_call_operand.vmem [shape: f32[68,32], index: 1, kind: input, shape index: {}]
  %s2 = inlined_call_operand.vmem [shape: f32[64,136], index: 2, kind: input, shape index: {}]
  %s3 = inlined_call_operand.hbm [shape: f32[408,256], index: 3, kind: input, shape index: {}]
  %s4 = inlined_call_operand.vmem [shape: f32[256,8], index: 4, kind: input, shape index: {}]
  %s5 = inlined_call_operand.vmem [shape: f32[8,256], index: 5, kind: input, shape index: {}]
  %s6 = inlined_call_operand.vmem [shape: f32[1,8], index: 6, kind: input, shape index: {}]
  %s7 = inlined_call_operand.vmem [shape: f32[1,8], index: 7, kind: input, shape index: {}]
  %s8 = inlined_call_operand.hbm [shape: f32[64,256], index: 8, kind: output, shape index: {}]
  %s9 = sld [smem:[#allocation0]]
  $region85: #{tpu_custom_call.1} parent=0
    _
  %s11 = ssub.s32 1, %s9
  %s12 = scalar_select 0, %s11, %s9
  $region1: #{tpu_custom_call.1} parent=0
    #allocation7 [shape = 'u8[417792]{0}', space=vmem, size = 0x66000, scoped, tag = 'input window, operand 3, single buffered']
    #allocation8 [shape = 's32[2]{0}', space=sflag, size = 0x8, scoped, tag = 'scoped memory for tpu_custom_call.1']
    #allocation9 [shape = 's32[2]{0}', space=sflag, size = 0x8, scoped, tag = 'scoped memory for tpu_custom_call.1']
    #allocation10 [shape = 'u8[131072]{0}', space=vmem, size = 0x20000, scoped, tag = 'output window, operand 0']
    %13 = vsyncpa [#allocation8], 0
    %14 = vsyncpa [#allocation9], 0
    %s15 = scalar_lea.sflag [#allocation9], 1
    %16 = vsyncpa %s15, 0
    loop: start=0, step=1, limit=4
    $region2: #{tpu_custom_call.1} parent=1 // loop_pre_header
      _
    $region3: #{tpu_custom_call.1} parent=1 // loop_header
      %s18 = sphi 0, %s22
      %p19 = scmp.ge.s32.totalorder %s18, 4
      %s25 = sphi 0, %s37
      %s26 = sphi 0, %s33
      %s27 = sphi 0, %s25
      %s28 = sphi 0, %s26
      %s29 = sphi 0, %s27
      %s30 = sphi 0, %s28
      %s44 = sphi 0, %s46
      %s47 = sphi 0, %s44
      %s48 = sphi 0, %s47
      %s64 = sphi 0, %s48
      %s68 = sphi 0, %s68
      %s70 = sphi 0, %s68
      %s71 = sphi 0, %s70
      %s85 = sphi 0, %s71
      %s89 = sphi 0, %s89
      %s91 = sphi 0, %s89
      %s92 = sphi 0, %s91
      %s106 = sphi 0, %s92
      %s110 = sphi 0, %s110
      %s112 = sphi 0, %s110
      %s113 = sphi 0, %s112
      %s127 = sphi 0, %s113
      %s131 = sphi 0, %s131
      %s133 = sphi 0, %s131
      %s134 = sphi 0, %s133
      %s148 = sphi 0, %s134
      %s152 = sphi 0, %s152
      %s154 = sphi 0, %s152
      %s155 = sphi 0, %s154
      %s169 = sphi 0, %s155
      %s173 = sphi 0, %s173
      %s175 = sphi 0, %s173
      %s176 = sphi 0, %s175
      %s190 = sphi 0, %s176
      %s194 = sphi 0, %s194
      %s196 = sphi 0, %s194
      %s197 = sphi 0, %s196
      %s211 = sphi 0, %s197
      %s219 = sphi 0, %s221
      %s222 = sphi 0, %s219
      %s223 = sphi 0, %s222
      %s239 = sphi 0, %s223
    $region4: #{tpu_custom_call.1} parent=1 // loop_header_branch
      %21 = sbr.rel (%p19) target = $region8
    $region5: #{tpu_custom_call.1} parent=1 // loop_body
      %s23 = ssub.s32 %s18, 1
      %s24 = ssub.s32 %s18, 2
      %s31 = sadd.s32 1, %s26
      %p32 = scmp.ge.s32.totalorder %s31, 1
      %s33 = scalar_select %p32, 0, %s31
      %s34 = sadd.s32 1, %s25
      %s35 = scalar_select %p32, %s34, %s25
      %p36 = scmp.ge.s32.totalorder %s35, 2
      %s37 = scalar_select %p36, 0, %s35
      %s38 = ssub.s32 1, %s25
      %s39 = smul.u32 %s26, %s38
      %s40 = ssub.s32 1, %s37
      %s41 = smul.u32 %s33, %s40
      %s42 = ssub.s32 %s39, %s41
      %p43 = scmp.eq.s32.totalorder %s42, 0
      %s45 = sadd.s32 %s44, 1
      %s46 = scalar_select %p43, %s44, %s45
      %p49 = pneg %p43
      %p50 = scmp.eq.s32.totalorder %s18, 1
      %p51 = por %p49, %p50
      %p52 = scmp.ne.s32.totalorder %s44, %s47
      %p53 = scmp.eq.s32.totalorder %s18, 0
      %p54 = por %p52, %p53
      %p55 = scmp.ne.s32.totalorder %s44, %s47
      %p56 = scmp.eq.s32.totalorder %s23, 1
      %p57 = por %p55, %p56
      %p58 = scmp.ne.s32.totalorder %s47, %s48
      %p59 = scmp.eq.s32.totalorder %s23, 0
      %p60 = por %p58, %p59
      %p61 = scmp.ne.s32.totalorder %s47, %s48
      %p62 = scmp.eq.s32.totalorder %s24, 1
      %p63 = por %p61, %p62
      %p65 = scmp.ne.s32.totalorder %s48, %s64
      %p66 = scmp.eq.s32.totalorder %s24, 0
      %p67 = por %p65, %p66
      %s69 = sadd.s32 %s68, 1
      %p72 = scmp.eq.s32.totalorder %s18, 1
      %p73 = scmp.ne.s32.totalorder %s68, %s70
      %p74 = scmp.eq.s32.totalorder %s18, 0
      %p75 = por %p73, %p74
      %p76 = scmp.ne.s32.totalorder %s68, %s70
      %p77 = scmp.eq.s32.totalorder %s23, 1
      %p78 = por %p76, %p77
      %p79 = scmp.ne.s32.totalorder %s70, %s71
      %p80 = scmp.eq.s32.totalorder %s23, 0
      %p81 = por %p79, %p80
      %p82 = scmp.ne.s32.totalorder %s70, %s71
      %p83 = scmp.eq.s32.totalorder %s24, 1
      %p84 = por %p82, %p83
      %p86 = scmp.ne.s32.totalorder %s71, %s85
      %p87 = scmp.eq.s32.totalorder %s24, 0
      %p88 = por %p86, %p87
      %s90 = sadd.s32 %s89, 1
      %p93 = scmp.eq.s32.totalorder %s18, 1
      %p94 = scmp.ne.s32.totalorder %s89, %s91
      %p95 = scmp.eq.s32.totalorder %s18, 0
      %p96 = por %p94, %p95
      %p97 = scmp.ne.s32.totalorder %s89, %s91
      %p98 = scmp.eq.s32.totalorder %s23, 1
      %p99 = por %p97, %p98
      %p100 = scmp.ne.s32.totalorder %s91, %s92
      %p101 = scmp.eq.s32.totalorder %s23, 0
      %p102 = por %p100, %p101
      %p103 = scmp.ne.s32.totalorder %s91, %s92
      %p104 = scmp.eq.s32.totalorder %s24, 1
      %p105 = por %p103, %p104
      %p107 = scmp.ne.s32.totalorder %s92, %s106
      %p108 = scmp.eq.s32.totalorder %s24, 0
      %p109 = por %p107, %p108
      %s111 = sadd.s32 %s110, 1
      %p114 = scmp.eq.s32.totalorder %s18, 1
      %p115 = scmp.ne.s32.totalorder %s110, %s112
      %p116 = scmp.eq.s32.totalorder %s18, 0
      %p117 = por %p115, %p116
      %p118 = scmp.ne.s32.totalorder %s110, %s112
      %p119 = scmp.eq.s32.totalorder %s23, 1
      %p120 = por %p118, %p119
      %p121 = scmp.ne.s32.totalorder %s112, %s113
      %p122 = scmp.eq.s32.totalorder %s23, 0
      %p123 = por %p121, %p122
      %p124 = scmp.ne.s32.totalorder %s112, %s113
      %p125 = scmp.eq.s32.totalorder %s24, 1
      %p126 = por %p124, %p125
      %p128 = scmp.ne.s32.totalorder %s113, %s127
      %p129 = scmp.eq.s32.totalorder %s24, 0
      %p130 = por %p128, %p129
      %s132 = sadd.s32 %s131, 1
      %p135 = scmp.eq.s32.totalorder %s18, 1
      %p136 = scmp.ne.s32.totalorder %s131, %s133
      %p137 = scmp.eq.s32.totalorder %s18, 0
      %p138 = por %p136, %p137
      %p139 = scmp.ne.s32.totalorder %s131, %s133
      %p140 = scmp.eq.s32.totalorder %s23, 1
      %p141 = por %p139, %p140
      %p142 = scmp.ne.s32.totalorder %s133, %s134
      %p143 = scmp.eq.s32.totalorder %s23, 0
      %p144 = por %p142, %p143
      %p145 = scmp.ne.s32.totalorder %s133, %s134
      %p146 = scmp.eq.s32.totalorder %s24, 1
      %p147 = por %p145, %p146
      %p149 = scmp.ne.s32.totalorder %s134, %s148
      %p150 = scmp.eq.s32.totalorder %s24, 0
      %p151 = por %p149, %p150
      %s153 = sadd.s32 %s152, 1
      %p156 = scmp.eq.s32.totalorder %s18, 1
      %p157 = scmp.ne.s32.totalorder %s152, %s154
      %p158 = scmp.eq.s32.totalorder %s18, 0
      %p159 = por %p157, %p158
      %p160 = scmp.ne.s32.totalorder %s152, %s154
      %p161 = scmp.eq.s32.totalorder %s23, 1
      %p162 = por %p160, %p161
      %p163 = scmp.ne.s32.totalorder %s154, %s155
      %p164 = scmp.eq.s32.totalorder %s23, 0
      %p165 = por %p163, %p164
      %p166 = scmp.ne.s32.totalorder %s154, %s155
      %p167 = scmp.eq.s32.totalorder %s24, 1
      %p168 = por %p166, %p167
      %p170 = scmp.ne.s32.totalorder %s155, %s169
      %p171 = scmp.eq.s32.totalorder %s24, 0
      %p172 = por %p170, %p171
      %s174 = sadd.s32 %s173, 1
      %p177 = scmp.eq.s32.totalorder %s18, 1
      %p178 = scmp.ne.s32.totalorder %s173, %s175
      %p179 = scmp.eq.s32.totalorder %s18, 0
      %p180 = por %p178, %p179
      %p181 = scmp.ne.s32.totalorder %s173, %s175
      %p182 = scmp.eq.s32.totalorder %s23, 1
      %p183 = por %p181, %p182
      %p184 = scmp.ne.s32.totalorder %s175, %s176
      %p185 = scmp.eq.s32.totalorder %s23, 0
      %p186 = por %p184, %p185
      %p187 = scmp.ne.s32.totalorder %s175, %s176
      %p188 = scmp.eq.s32.totalorder %s24, 1
      %p189 = por %p187, %p188
      %p191 = scmp.ne.s32.totalorder %s176, %s190
      %p192 = scmp.eq.s32.totalorder %s24, 0
      %p193 = por %p191, %p192
      %s195 = sadd.s32 %s194, 1
      %p198 = scmp.eq.s32.totalorder %s18, 1
      %p199 = scmp.ne.s32.totalorder %s194, %s196
      %p200 = scmp.eq.s32.totalorder %s18, 0
      %p201 = por %p199, %p200
      %p202 = scmp.ne.s32.totalorder %s194, %s196
      %p203 = scmp.eq.s32.totalorder %s23, 1
      %p204 = por %p202, %p203
      %p205 = scmp.ne.s32.totalorder %s196, %s197
      %p206 = scmp.eq.s32.totalorder %s23, 0
      %p207 = por %p205, %p206
      %p208 = scmp.ne.s32.totalorder %s196, %s197
      %p209 = scmp.eq.s32.totalorder %s24, 1
      %p210 = por %p208, %p209
      %p212 = scmp.ne.s32.totalorder %s197, %s211
      %p213 = scmp.eq.s32.totalorder %s24, 0
      %p214 = por %p212, %p213
      %s215 = smul.u32 %s26, %s25
      %s216 = smul.u32 %s33, %s37
      %s217 = ssub.s32 %s215, %s216
      %p218 = scmp.eq.s32.totalorder %s217, 0
      %s220 = sadd.s32 %s219, 1
      %s221 = scalar_select %p218, %s219, %s220
      %p224 = pneg %p218
      %p225 = scmp.eq.s32.totalorder %s18, 1
      %p226 = por %p224, %p225
      %p227 = scmp.ne.s32.totalorder %s219, %s222
      %p228 = scmp.eq.s32.totalorder %s18, 0
      %p229 = por %p227, %p228
      %p230 = scmp.ne.s32.totalorder %s219, %s222
      %p231 = scmp.eq.s32.totalorder %s23, 1
      %p232 = por %p230, %p231
      %p233 = scmp.ne.s32.totalorder %s222, %s223
      %p234 = scmp.eq.s32.totalorder %s23, 0
      %p235 = por %p233, %p234
      %p236 = scmp.ne.s32.totalorder %s222, %s223
      %p237 = scmp.eq.s32.totalorder %s24, 1
      %p238 = por %p236, %p237
      %p240 = scmp.ne.s32.totalorder %s223, %s239
      %p241 = scmp.eq.s32.totalorder %s24, 0
      %p242 = por %p240, %p241
      %p243 = scmp.le.s32.totalorder 1, %s18
      %p244 = scmp.lt.s32.totalorder %s18, 3
      %p245 = pnand %p243, %p244
      %p246 = pneg %p245
      // Predicated region
      $region9: #{tpu_custom_call.1} parent=5 // pred_check
        _
      $region10: #{tpu_custom_call.1} parent=5 // pred_check_branch
        %248 = sbr.rel (%p245) target = $region12
      $region11: #{tpu_custom_call.1} parent=5 // pred_region
        %s249 = ssub.s32 %s18, 1
        // Predicated region
        $region13: #{tpu_custom_call.1} parent=11 // pred_check
          %p250 = pneg %p81
        $region14: #{tpu_custom_call.1} parent=11 // pred_check_branch
          %252 = sbr.rel (%p250) target = $region16
        $region15: #{tpu_custom_call.1} parent=11 // pred_region
          _
        $region16: #{tpu_custom_call.1} parent=11 // pred_fallthru
          _
        // Predicated region
        $region17: #{tpu_custom_call.1} parent=11 // pred_check
          %p253 = pneg %p102
        $region18: #{tpu_custom_call.1} parent=11 // pred_check_branch
          %255 = sbr.rel (%p253) target = $region20
        $region19: #{tpu_custom_call.1} parent=11 // pred_region
          _
        $region20: #{tpu_custom_call.1} parent=11 // pred_fallthru
          _
        // Predicated region
        $region21: #{tpu_custom_call.1} parent=11 // pred_check
          %p256 = pneg %p123
        $region22: #{tpu_custom_call.1} parent=11 // pred_check_branch
          %258 = sbr.rel (%p256) target = $region24
        $region23: #{tpu_custom_call.1} parent=11 // pred_region
          %s260 = ssub.s32 13056, 13056
          %261 = vsyncadd [#allocation8], %s260
          %s262 = sshll.u32 [#allocation7], 4
          %s263 = int_to_ptr.vmem [resolvable:$true] %s262
          %268 = dma.hbm_to_vmem [thread:$0]  %s3, 13056, %s263, [#allocation8], 256, 256, 16
        $region24: #{tpu_custom_call.1} parent=11 // pred_fallthru
          _
        // Predicated region
        $region25: #{tpu_custom_call.1} parent=11 // pred_check
          %p269 = pneg %p144
        $region26: #{tpu_custom_call.1} parent=11 // pred_check_branch
          %271 = sbr.rel (%p269) target = $region28
        $region27: #{tpu_custom_call.1} parent=11 // pred_region
          _
        $region28: #{tpu_custom_call.1} parent=11 // pred_fallthru
          _
        // Predicated region
        $region29: #{tpu_custom_call.1} parent=11 // pred_check
          %p272 = pneg %p165
        $region30: #{tpu_custom_call.1} parent=11 // pred_check_branch
          %274 = sbr.rel (%p272) target = $region32
        $region31: #{tpu_custom_call.1} parent=11 // pred_region
          _
        $region32: #{tpu_custom_call.1} parent=11 // pred_fallthru
          _
        // Predicated region
        $region33: #{tpu_custom_call.1} parent=11 // pred_check
          %p275 = pneg %p186
        $region34: #{tpu_custom_call.1} parent=11 // pred_check_branch
          %277 = sbr.rel (%p275) target = $region36
        $region35: #{tpu_custom_call.1} parent=11 // pred_region
          _
        $region36: #{tpu_custom_call.1} parent=11 // pred_fallthru
          _
        // Predicated region
        $region37: #{tpu_custom_call.1} parent=11 // pred_check
          %p278 = pneg %p207
        $region38: #{tpu_custom_call.1} parent=11 // pred_check_branch
          %280 = sbr.rel (%p278) target = $region40
        $region39: #{tpu_custom_call.1} parent=11 // pred_region
          _
        $region40: #{tpu_custom_call.1} parent=11 // pred_fallthru
          _
      $region12: #{tpu_custom_call.1} parent=5 // pred_fallthru
        _
      %p281 = scmp.lt.s32.totalorder %s18, 2
      // Predicated region
      $region41: #{tpu_custom_call.1} parent=5 // pred_check
        %p282 = pneg %p281
      $region42: #{tpu_custom_call.1} parent=5 // pred_check_branch
        %284 = sbr.rel (%p282) target = $region44
      $region43: #{tpu_custom_call.1} parent=5 // pred_region
        // Predicated region
        $region45: #{tpu_custom_call.1} parent=43 // pred_check
          %p285 = pneg %p54
        $region46: #{tpu_custom_call.1} parent=43 // pred_check_branch
          %287 = sbr.rel (%p285) target = $region48
        $region47: #{tpu_custom_call.1} parent=43 // pred_region
          %s288 = ssub.s32 1, %s25
          %s289 = smul.u32 %s26, %s288
          %s290 = smul.u32 4, %s289
          %p291 = scmp.lt.s32.totalorder %s290, 3
          %s292 = scalar_select %p291, %s290, 3
          %s293 = smul.addr %s292, 8
          %s294 = scalar_lea.vmem %s0, %s293
          %s295 = ssub.s32 1, %s25
          %s296 = smul.u32 %s26, %s295
          %s297 = smul.u32 4, %s296
        $region48: #{tpu_custom_call.1} parent=43 // pred_fallthru
          _
      $region44: #{tpu_custom_call.1} parent=5 // pred_fallthru
        _
      %p298 = scmp.le.s32.totalorder 1, %s18
      %p299 = scmp.lt.s32.totalorder %s18, 3
      %p300 = pnand %p298, %p299
      %p301 = pneg %p300
      // Predicated region
      $region49: #{tpu_custom_call.1} parent=5 // pred_check
        _
      $region50: #{tpu_custom_call.1} parent=5 // pred_check_branch
        %303 = sbr.rel (%p300) target = $region52
      $region51: #{tpu_custom_call.1} parent=5 // pred_region
        %s304 = ssub.s32 %s18, 1
        // Predicated region
        $region53: #{tpu_custom_call.1} parent=51 // pred_check
          %p305 = pneg %p123
        $region54: #{tpu_custom_call.1} parent=51 // pred_check_branch
          %307 = sbr.rel (%p305) target = $region56
        $region55: #{tpu_custom_call.1} parent=51 // pred_region
          %308 = dma.done [#allocation8], 13056
        $region56: #{tpu_custom_call.1} parent=51 // pred_fallthru
          _
        %s309 = ssub.s32 1, %s27
        %s310 = smul.u32 %s28, %s309
        %s311 = smul.u32 4, %s310
        %p312 = scmp.lt.s32.totalorder %s311, 3
        %s313 = scalar_select %p312, %s311, 3
        %s314 = smul.addr %s313, 8
        %s315 = scalar_lea.vmem %s0, %s314
        %p316 = pneg %p60
        %p317 = pneg %p57
        %p318 = pneg %p81
        %p319 = pneg %p78
        %p320 = pneg %p102
        %p321 = pneg %p99
        %p322 = pneg %p123
        %p323 = pneg %p120
        %p324 = pneg %p144
        %p325 = pneg %p141
        %p326 = pneg %p165
        %p327 = pneg %p162
        %p328 = pneg %p186
        %p329 = pneg %p183
        %p330 = pneg %p207
        %p331 = pneg %p204
        %p332 = pneg %p235
        %p333 = pneg %p232
        %s334 = sand.u32 %s222, 1
        %s335 = scalar_lea.sflag [#allocation9], %s334
        %s336 = sand.u32 %s222, 1
        %s337 = smul.addr %s336, 128
        %s338 = scalar_lea.vmem [#allocation10], %s337
        %s339 = ssub.s32 1, %s27
        %s340 = smul.u32 %s28, %s339
        %s341 = smul.u32 4, %s340
        %p342 = scmp.lt.s32.totalorder %s341, 3
        %s343 = scalar_select %p342, %s341, 3
        %s344 = smul.addr %s343, 8
        %s345 = scalar_lea.vmem %s0, %s344
        %s346 = ssub.s32 1, %s27
        %s347 = smul.u32 %s28, %s346
        %s348 = smul.u32 4, %s347
        %s349 = smul.u32 %s28, %s27
        %s350 = smul.u32 8, %s349
        %p351 = scmp.eq.s32.totalorder %s27, 0
        %p352 = scmp.eq.s32.totalorder %s28, 0
        %p353 = pnand %p351, %p352
        %p354 = pneg %p353
        // Predicated region
        $region57: #{tpu_custom_call.1} parent=51 // pred_check
          _
        $region58: #{tpu_custom_call.1} parent=51 // pred_check_branch
          %356 = sbr.rel (%p353) target = $region60
        $region59: #{tpu_custom_call.1} parent=51 // pred_region
          %v357 = vlaneseq
          %vm358 = vcmp.ge.s32.totalorder %v357, 0
          %vm359 = vcmp.lt.s32.totalorder %v357, 256
          %vm360 = vmand %vm358, %vm359
          %361 = vst.msk [vmem:[#allocation3] sm:$0x3] %vm360, 0.0
          %362 = vst.msk [vmem:[#allocation4] sm:$0x3] %vm360, 0.0
        $region60: #{tpu_custom_call.1} parent=51 // pred_fallthru
          _
        // Predicated region
        $region61: #{tpu_custom_call.1} parent=51 // pred_check
          %p363 = pneg %p351
        $region62: #{tpu_custom_call.1} parent=51 // pred_check_branch
          %365 = sbr.rel (%p363) target = $region64
        $region63: #{tpu_custom_call.1} parent=51 // pred_region
          %v366 = vld [vmem:[%s345] sm:$0xff]
          %v367 = vld [vmem:[%s345 + $0x8] sm:$0xff]
          %v368 = vld [vmem:[%s345 + $0x10] sm:$0xff]
          %v369 = vld [vmem:[%s345 + $0x18] sm:$0xff]
          %v370 = vld [vmem:[%s2] sm:$0xff]
          %v371 = vld [vmem:[%s2 + $0x8] sm:$0xff]
          %v372 = vld [vmem:[%s2 + $0x10] sm:$0xff]
          %v373 = vld [vmem:[%s2 + $0x18] sm:$0xff]
          %v374 = vld [vmem:[%s2 + $0x20] sm:$0xff]
          %v375 = vld [vmem:[%s2 + $0x28] sm:$0xff]
          %v376 = vld [vmem:[%s2 + $0x30] sm:$0xff]
          %v377 = vld [vmem:[%s2 + $0x38] sm:$0xff]
          %v378 = vld [vmem:[%s2 + $0x40] sm:$0xff]
          %v379 = vld [vmem:[%s2 + $0x48] sm:$0xff]
          %v380 = vld [vmem:[%s2 + $0x50] sm:$0xff]
          %v381 = vld [vmem:[%s2 + $0x58] sm:$0xff]
          %v382 = vld [vmem:[%s2 + $0x60] sm:$0xff]
          %v383 = vld [vmem:[%s2 + $0x68] sm:$0xff]
          %v384 = vld [vmem:[%s2 + $0x70] sm:$0xff]
          %v385 = vld [vmem:[%s2 + $0x78] sm:$0xff]
          %vm386 = vcmask 523264
          %v388 = vsel %vm386, %v366, 0
          %v391 = vsel %vm386, %v367, 0
          %v394 = vsel %vm386, %v368, 0
          %v397 = vsel %vm386, %v369, 0
          %399 = vmatprep.subr.mxu0 %v371
          %400 = vmatpush1.msra.mxu0 %v370
          %401 = vmatprep.subr.mxu0 %v373
          %402 = vmatpush1.msra.mxu0 %v372
          %403 = vmatprep.subr.mxu0 %v375
          %404 = vmatpush1.msra.mxu0 %v374
          %405 = vmatprep.subr.mxu0 %v377
          %406 = vmatpush1.msra.mxu0 %v376
          %407 = vmatprep.subr.mxu0 %v379
          %408 = vmatpush1.msra.mxu0 %v378
          %409 = vmatprep.subr.mxu0 %v381
          %410 = vmatpush1.msra.mxu0 %v380
          %411 = vmatprep.subr.mxu0 %v383
          %412 = vmatpush1.msra.mxu0 %v382
          %413 = vmatprep.subr.mxu0 %v385
          %414 = vmatpush1.msra.mxu0 %v384
          %415 = vmatprep.subr.mxu0 0.0
          %416 = vmatpush1.msra.mxu0 0.0
          %417 = vmatprep.subr.mxu0 0.0
          %418 = vmatpush1.msra.mxu0 0.0
          %419 = vmatprep.subr.mxu0 0.0
          %420 = vmatpush1.msra.mxu0 0.0
          %421 = vmatprep.subr.mxu0 0.0
          %422 = vmatpush1.msra.mxu0 0.0
          %423 = vmatprep.subr.mxu0 0.0
          %424 = vmatpush1.msra.mxu0 0.0
          %425 = vmatprep.subr.mxu0 0.0
          %426 = vmatpush1.msra.mxu0 0.0
          %427 = vmatprep.subr.mxu0 0.0
          %428 = vmatpush1.msra.mxu0 0.0
          %429 = vmatprep.subr.mxu0 0.0
          %430 = vmatpush1.msra.mxu0 0.0
          %431 = vmatprep.subr.mxu0 0.0
          %432 = vmatpush1.msra.mxu0 0.0
          %433 = vmatprep.subr.mxu0 0.0
          %434 = vmatpush1.msra.mxu0 0.0
          %435 = vmatprep.subr.mxu0 0.0
          %436 = vmatpush1.msra.mxu0 0.0
          %437 = vmatprep.subr.mxu0 0.0
          %438 = vmatpush1.msra.mxu0 0.0
          %439 = vmatprep.subr.mxu0 0.0
          %440 = vmatpush1.msra.mxu0 0.0
          %441 = vmatprep.subr.mxu0 0.0
          %442 = vmatpush1.msra.mxu0 0.0
          %443 = vmatprep.subr.mxu0 0.0
          %444 = vmatpush1.msra.mxu0 0.0
          %445 = vmatprep.subr.mxu0 0.0
          %446 = vmatpush1.msra.mxu0 0.0
          %447 = vmatprep.subr.mxu0 0.0
          %448 = vmatpush1.msra.mxu0 0.0
          %449 = vmatprep.subr.mxu0 0.0
          %450 = vmatpush1.msra.mxu0 0.0
          %451 = vmatprep.subr.mxu0 0.0
          %452 = vmatpush1.msra.mxu0 0.0
          %453 = vmatprep.subr.mxu0 0.0
          %454 = vmatpush1.msra.mxu0 0.0
          %455 = vmatprep.subr.mxu0 0.0
          %456 = vmatpush1.msra.mxu0 0.0
          %457 = vmatprep.subr.mxu0 0.0
          %458 = vmatpush1.msra.mxu0 0.0
          %459 = vmatprep.subr.mxu0 0.0
          %460 = vmatpush1.msra.mxu0 0.0
          %461 = vmatprep.subr.mxu0 0.0
          %462 = vmatpush1.msra.mxu0 0.0
          %463 = vmatprep.mubr.f32.mxu0 0.0
          %464 = vmatmul.mubr.f32.gmra.mrb[0].mxu0 %v388
          %v465 = vpop.f32.mrb[0].mxu0
          %v466 = vadd.f32 0.0, %v465
          %v467 = vpop.f32.mrb[0].mxu0
          %v468 = vadd.f32 0.0, %v467
          %469 = vmatprep.mubr.f32.mxu0 0.0
          %470 = vmatmul.mubr.f32.gmra.mrb[0].mxu0 %v391
          %v471 = vpop.f32.mrb[0].mxu0
          %v472 = vadd.f32 0.0, %v471
          %v473 = vpop.f32.mrb[0].mxu0
          %v474 = vadd.f32 0.0, %v473
          %475 = vmatprep.mubr.f32.mxu0 0.0
          %476 = vmatmul.mubr.f32.gmra.mrb[0].mxu0 %v394
          %v477 = vpop.f32.mrb[0].mxu0
          %v478 = vadd.f32 0.0, %v477
          %v479 = vpop.f32.mrb[0].mxu0
          %v480 = vadd.f32 0.0, %v479
          %481 = vmatprep.mubr.f32.mxu0 0.0
          %482 = vmatmul.mubr.f32.gmra.mrb[0].mxu0 %v397
          %v483 = vpop.f32.mrb[0].mxu0
          %v484 = vadd.f32 0.0, %v483
          %v485 = vpop.f32.mrb[0].mxu0
          %v486 = vadd.f32 0.0, %v485
          %487 = vdwg.mxu0
          %v488 = vld [vmem:[%s1] sm:$0xff]
          %v489 = vld [vmem:[%s1 + $0x8] sm:$0xff]
          %v490 = vld [vmem:[%s1 + $0x10] sm:$0xff]
          %v491 = vld [vmem:[%s1 + $0x18] sm:$0xff]
          %v492 = vld [vmem:[%s1 + $0x20] sm:$0xff]
          %v493 = vld [vmem:[%s1 + $0x28] sm:$0xff]
          %v494 = vld [vmem:[%s1 + $0x30] sm:$0xff]
          %v495 = vld [vmem:[%s1 + $0x38] sm:$0xff]
          %v496 = vld [vmem:[%s1 + $0x40] sm:$0xf]
          %vm497 = vcmask 261120
          %v499 = vsel %vm497, %v488, 0
          %v502 = vsel %vm497, %v489, 0
          %v505 = vsel %vm497, %v490, 0
          %v508 = vsel %vm497, %v491, 0
          %v511 = vsel %vm497, %v492, 0
          %v514 = vsel %vm497, %v493, 0
          %v517 = vsel %vm497, %v494, 0
          %v520 = vsel %vm497, %v495, 0
          %v523 = vsel %vm497, %v496, 0
          %525 = vmatprep.subr.mxu0 %v468
          %526 = vmatpush1.msra.mxu0 %v466
          %527 = vmatprep.subr.mxu0 %v474
          %528 = vmatpush1.msra.mxu0 %v472
          %529 = vmatprep.subr.mxu0 %v480
          %530 = vmatpush1.msra.mxu0 %v478
          %531 = vmatprep.subr.mxu0 %v486
          %532 = vmatpush1.msra.mxu0 %v484
          %533 = vmatprep.subr.mxu0 0.0
          %534 = vmatpush1.msra.mxu0 0.0
          %535 = vmatprep.subr.mxu0 0.0
          %536 = vmatpush1.msra.mxu0 0.0
          %537 = vmatprep.subr.mxu0 0.0
          %538 = vmatpush1.msra.mxu0 0.0
          %539 = vmatprep.subr.mxu0 0.0
          %540 = vmatpush1.msra.mxu0 0.0
          %541 = vmatprep.subr.mxu0 0.0
          %542 = vmatpush1.msra.mxu0 0.0
          %543 = vmatprep.subr.mxu0 0.0
          %544 = vmatpush1.msra.mxu0 0.0
          %545 = vmatprep.subr.mxu0 0.0
          %546 = vmatpush1.msra.mxu0 0.0
          %547 = vmatprep.subr.mxu0 0.0
          %548 = vmatpush1.msra.mxu0 0.0
          %549 = vmatprep.subr.mxu0 0.0
          %550 = vmatpush1.msra.mxu0 0.0
          %551 = vmatprep.subr.mxu0 0.0
          %552 = vmatpush1.msra.mxu0 0.0
          %553 = vmatprep.subr.mxu0 0.0
          %554 = vmatpush1.msra.mxu0 0.0
          %555 = vmatprep.subr.mxu0 0.0
          %556 = vmatpush1.msra.mxu0 0.0
          %557 = vmatprep.subr.mxu0 0.0
          %558 = vmatpush1.msra.mxu0 0.0
          %559 = vmatprep.subr.mxu0 0.0
          %560 = vmatpush1.msra.mxu0 0.0
          %561 = vmatprep.subr.mxu0 0.0
          %562 = vmatpush1.msra.mxu0 0.0
          %563 = vmatprep.subr.mxu0 0.0
          %564 = vmatpush1.msra.mxu0 0.0
          %565 = vmatprep.subr.mxu0 0.0
          %566 = vmatpush1.msra.mxu0 0.0
          %567 = vmatprep.subr.mxu0 0.0
          %568 = vmatpush1.msra.mxu0 0.0
          %569 = vmatprep.subr.mxu0 0.0
          %570 = vmatpush1.msra.mxu0 0.0
          %571 = vmatprep.subr.mxu0 0.0
          %572 = vmatpush1.msra.mxu0 0.0
          %573 = vmatprep.subr.mxu0 0.0
          %574 = vmatpush1.msra.mxu0 0.0
          %575 = vmatprep.subr.mxu0 0.0
          %576 = vmatpush1.msra.mxu0 0.0
          %577 = vmatprep.subr.mxu0 0.0
          %578 = vmatpush1.msra.mxu0 0.0
          %579 = vmatprep.subr.mxu0 0.0
          %580 = vmatpush1.msra.mxu0 0.0
          %581 = vmatprep.subr.mxu0 0.0
          %582 = vmatpush1.msra.mxu0 0.0
          %583 = vmatprep.subr.mxu0 0.0
          %584 = vmatpush1.msra.mxu0 0.0
          %585 = vmatprep.subr.mxu0 0.0
          %586 = vmatpush1.msra.mxu0 0.0
          %587 = vmatprep.subr.mxu0 0.0
          %588 = vmatpush1.msra.mxu0 0.0
          %589 = vmatprep.mubr.f32.mxu0 0.0
          %590 = vmatmul.mubr.f32.gmra.mrb[0].mxu0 %v499
          %v591 = vpop.f32.mrb[0].mxu0
          %v592 = vadd.f32 0.0, %v591
          %v593 = vpop.f32.mrb[0].mxu0
          %v594 = vadd.f32 0.0, %v593
          %595 = vmatprep.mubr.f32.mxu0 0.0
          %596 = vmatmul.mubr.f32.gmra.mrb[0].mxu0 %v502
          %v597 = vpop.f32.mrb[0].mxu0
          %v598 = vadd.f32 0.0, %v597
          %v599 = vpop.f32.mrb[0].mxu0
          %v600 = vadd.f32 0.0, %v599
          %601 = vmatprep.mubr.f32.mxu0 0.0
          %602 = vmatmul.mubr.f32.gmra.mrb[0].mxu0 %v505
          %v603 = vpop.f32.mrb[0].mxu0
          %v604 = vadd.f32 0.0, %v603
          %v605 = vpop.f32.mrb[0].mxu0
          %v606 = vadd.f32 0.0, %v605
          %607 = vmatprep.mubr.f32.mxu0 0.0
          %608 = vmatmul.mubr.f32.gmra.mrb[0].mxu0 %v508
          %v609 = vpop.f32.mrb[0].mxu0
          %v610 = vadd.f32 0.0, %v609
          %v611 = vpop.f32.mrb[0].mxu0
          %v612 = vadd.f32 0.0, %v611
          %613 = vmatprep.mubr.f32.mxu0 0.0
          %614 = vmatmul.mubr.f32.gmra.mrb[0].mxu0 %v511
          %v615 = vpop.f32.mrb[0].mxu0
          %v616 = vadd.f32 0.0, %v615
          %v617 = vpop.f32.mrb[0].mxu0
          %v618 = vadd.f32 0.0, %v617
          %619 = vmatprep.mubr.f32.mxu0 0.0
          %620 = vmatmul.mubr.f32.gmra.mrb[0].mxu0 %v514
          %v621 = vpop.f32.mrb[0].mxu0
          %v622 = vadd.f32 0.0, %v621
          %v623 = vpop.f32.mrb[0].mxu0
          %v624 = vadd.f32 0.0, %v623
          %625 = vmatprep.mubr.f32.mxu0 0.0
          %626 = vmatmul.mubr.f32.gmra.mrb[0].mxu0 %v517
          %v627 = vpop.f32.mrb[0].mxu0
          %v628 = vadd.f32 0.0, %v627
          %v629 = vpop.f32.mrb[0].mxu0
          %v630 = vadd.f32 0.0, %v629
          %631 = vmatprep.mubr.f32.mxu0 0.0
          %632 = vmatmul.mubr.f32.gmra.mrb[0].mxu0 %v520
          %v633 = vpop.f32.mrb[0].mxu0
          %v634 = vadd.f32 0.0, %v633
          %v635 = vpop.f32.mrb[0].mxu0
          %v636 = vadd.f32 0.0, %v635
          %637 = vmatprep.mubr.f32.mxu0 0.0
          %638 = vmatmul.mubr.f32.gmra.mrb[0].mxu0 %v523
          %v639 = vpop.f32.mrb[0].mxu0
          %v640 = vadd.f32 0.0, %v639
          %v641 = vpop.f32.mrb[0].mxu0
          %v642 = vadd.f32 0.0, %v641
          %643 = vdwg.mxu0
          %vm654 = vcmask 1046528
          %v655 = vrot.slane %v592, 1
          %v656 = vrot.slane %v598, 1
          %v657 = vsel %vm654, %v655, %v656
          %v658 = vrot.slane %v594, 1
          %v659 = vrot.slane %v600, 1
          %v660 = vsel %vm654, %v658, %v659
          %v661 = vrot.slane %v604, 1
          %v662 = vsel %vm654, %v656, %v661
          %v663 = vrot.slane %v606, 1
          %v664 = vsel %vm654, %v659, %v663
          %v665 = vrot.slane %v610, 1
          %v666 = vsel %vm654, %v661, %v665
          %v667 = vrot.slane %v612, 1
          %v668 = vsel %vm654, %v663, %v667
          %v669 = vrot.slane %v616, 1
          %v670 = vsel %vm654, %v665, %v669
          %v671 = vrot.slane %v618, 1
          %v672 = vsel %vm654, %v667, %v671
          %673 = vrot.lane.b32.xlu0 %v657, 8
          %v674 = vpop.permute.xlu0 %673
          %675 = vrot.lane.b32.xlu0 %v660, 8
          %v676 = vpop.permute.xlu0 %675
          %677 = vrot.lane.b32.xlu0 %v662, 8
          %v678 = vpop.permute.xlu0 %677
          %679 = vrot.lane.b32.xlu0 %v664, 8
          %v680 = vpop.permute.xlu0 %679
          %681 = vrot.lane.b32.xlu0 %v666, 8
          %v682 = vpop.permute.xlu0 %681
          %683 = vrot.lane.b32.xlu0 %v668, 8
          %v684 = vpop.permute.xlu0 %683
          %685 = vrot.lane.b32.xlu0 %v670, 8
          %v686 = vpop.permute.xlu0 %685
          %687 = vrot.lane.b32.xlu0 %v672, 8
          %v688 = vpop.permute.xlu0 %687
          %vm689 = vcmask 64512
          %v690 = vsel %vm689, %v674, %v676
          %v691 = vsel %vm689, %v678, %v680
          %v692 = vsel %vm689, %v682, %v684
          %v693 = vsel %vm689, %v686, %v688
          %vm702 = vcmask 1045504
          %v703 = vrot.slane %v592, 2
          %v704 = vrot.slane %v598, 2
          %v705 = vsel %vm702, %v703, %v704
          %v706 = vrot.slane %v594, 2
          %v707 = vrot.slane %v600, 2
          %v708 = vsel %vm702, %v706, %v707
          %v709 = vrot.slane %v604, 2
          %v710 = vsel %vm702, %v704, %v709
          %v711 = vrot.slane %v606, 2
          %v712 = vsel %vm702, %v707, %v711
          %v713 = vrot.slane %v610, 2
          %v714 = vsel %vm702, %v709, %v713
          %v715 = vrot.slane %v612, 2
          %v716 = vsel %vm702, %v711, %v715
          %v717 = vrot.slane %v616, 2
          %v718 = vsel %vm702, %v713, %v717
          %v719 = vrot.slane %v618, 2
          %v720 = vsel %vm702, %v715, %v719
          %721 = vrot.lane.b32.xlu0 %v705, 16
          %v722 = vpop.permute.xlu0 %721
          %723 = vrot.lane.b32.xlu0 %v708, 16
          %v724 = vpop.permute.xlu0 %723
          %725 = vrot.lane.b32.xlu0 %v710, 16
          %v726 = vpop.permute.xlu0 %725
          %727 = vrot.lane.b32.xlu0 %v712, 16
          %v728 = vpop.permute.xlu0 %727
          %729 = vrot.lane.b32.xlu0 %v714, 16
          %v730 = vpop.permute.xlu0 %729
          %731 = vrot.lane.b32.xlu0 %v716, 16
          %v732 = vpop.permute.xlu0 %731
          %733 = vrot.lane.b32.xlu0 %v718, 16
          %v734 = vpop.permute.xlu0 %733
          %735 = vrot.lane.b32.xlu0 %v720, 16
          %v736 = vpop.permute.xlu0 %735
          %vm737 = vcmask 130048
          %v738 = vsel %vm737, %v722, %v724
          %v739 = vsel %vm737, %v726, %v728
          %v740 = vsel %vm737, %v730, %v732
          %v741 = vsel %vm737, %v734, %v736
          %v746 = vsel %vm689, %v594, %v674
          %v747 = vsel %vm689, %v600, %v678
          %v748 = vsel %vm689, %v606, %v682
          %v749 = vsel %vm689, %v612, %v686
          %v750 = vsel %vm737, %v690, %v722
          %v751 = vsel %vm737, %v691, %v726
          %v752 = vsel %vm737, %v692, %v730
          %v753 = vsel %vm737, %v693, %v734
          %v762 = vrot.slane %v622, 1
          %v763 = vsel %vm654, %v669, %v762
          %v764 = vrot.slane %v624, 1
          %v765 = vsel %vm654, %v671, %v764
          %v766 = vrot.slane %v628, 1
          %v767 = vsel %vm654, %v762, %v766
          %v768 = vrot.slane %v630, 1
          %v769 = vsel %vm654, %v764, %v768
          %v770 = vrot.slane %v634, 1
          %v771 = vsel %vm654, %v766, %v770
          %v772 = vrot.slane %v636, 1
          %v773 = vsel %vm654, %v768, %v772
          %v774 = vrot.slane %v640, 1
          %v775 = vsel %vm654, %v770, %v774
          %v776 = vrot.slane %v642, 1
          %v777 = vsel %vm654, %v772, %v776
          %778 = vrot.lane.b32.xlu0 %v763, 8
          %v779 = vpop.permute.xlu0 %778
          %780 = vrot.lane.b32.xlu0 %v765, 8
          %v781 = vpop.permute.xlu0 %780
          %782 = vrot.lane.b32.xlu0 %v767, 8
          %v783 = vpop.permute.xlu0 %782
          %784 = vrot.lane.b32.xlu0 %v769, 8
          %v785 = vpop.permute.xlu0 %784
          %786 = vrot.lane.b32.xlu0 %v771, 8
          %v787 = vpop.permute.xlu0 %786
          %788 = vrot.lane.b32.xlu0 %v773, 8
          %v789 = vpop.permute.xlu0 %788
          %790 = vrot.lane.b32.xlu0 %v775, 8
          %v791 = vpop.permute.xlu0 %790
          %792 = vrot.lane.b32.xlu0 %v777, 8
          %v793 = vpop.permute.xlu0 %792
          %794 = vrot.lane.b32.xlu0 %v774, 8
          %v795 = vpop.permute.xlu0 %794
          %796 = vrot.lane.b32.xlu0 %v776, 8
          %v797 = vpop.permute.xlu0 %796
          %v798 = vsel %vm689, %v779, %v781
          %v799 = vsel %vm689, %v783, %v785
          %v800 = vsel %vm689, %v787, %v789
          %v801 = vsel %vm689, %v791, %v793
          %v802 = vsel %vm689, %v795, %v797
          %v813 = vrot.slane %v622, 2
          %v814 = vsel %vm702, %v717, %v813
          %v815 = vrot.slane %v624, 2
          %v816 = vsel %vm702, %v719, %v815
          %v817 = vrot.slane %v628, 2
          %v818 = vsel %vm702, %v813, %v817
          %v819 = vrot.slane %v630, 2
          %v820 = vsel %vm702, %v815, %v819
          %v821 = vrot.slane %v634, 2
          %v822 = vsel %vm702, %v817, %v821
          %v823 = vrot.slane %v636, 2
          %v824 = vsel %vm702, %v819, %v823
          %v825 = vrot.slane %v640, 2
          %v826 = vsel %vm702, %v821, %v825
          %v827 = vrot.slane %v642, 2
          %v828 = vsel %vm702, %v823, %v827
          %829 = vrot.lane.b32.xlu0 %v814, 16
          %v830 = vpop.permute.xlu0 %829
          %831 = vrot.lane.b32.xlu0 %v816, 16
          %v832 = vpop.permute.xlu0 %831
          %833 = vrot.lane.b32.xlu0 %v818, 16
          %v834 = vpop.permute.xlu0 %833
          %835 = vrot.lane.b32.xlu0 %v820, 16
          %v836 = vpop.permute.xlu0 %835
          %837 = vrot.lane.b32.xlu0 %v822, 16
          %v838 = vpop.permute.xlu0 %837
          %839 = vrot.lane.b32.xlu0 %v824, 16
          %v840 = vpop.permute.xlu0 %839
          %841 = vrot.lane.b32.xlu0 %v826, 16
          %v842 = vpop.permute.xlu0 %841
          %843 = vrot.lane.b32.xlu0 %v828, 16
          %v844 = vpop.permute.xlu0 %843
          %845 = vrot.lane.b32.xlu0 %v825, 16
          %v846 = vpop.permute.xlu0 %845
          %847 = vrot.lane.b32.xlu0 %v827, 16
          %v848 = vpop.permute.xlu0 %847
          %v849 = vsel %vm737, %v830, %v832
          %v850 = vsel %vm737, %v834, %v836
          %v851 = vsel %vm737, %v838, %v840
          %v852 = vsel %vm737, %v842, %v844
          %v853 = vsel %vm737, %v846, %v848
          %v859 = vsel %vm689, %v618, %v779
          %v860 = vsel %vm689, %v624, %v783
          %v861 = vsel %vm689, %v630, %v787
          %v862 = vsel %vm689, %v636, %v791
          %v863 = vsel %vm689, %v642, %v795
          %v864 = vsel %vm737, %v798, %v830
          %v865 = vsel %vm737, %v799, %v834
          %v866 = vsel %vm737, %v800, %v838
          %v867 = vsel %vm737, %v801, %v842
          %v868 = vsel %vm737, %v802, %v846
          %v879 = vrot.slane %v859, 2
          %v880 = vrot.slane %v860, 2
          %v881 = vsel %vm702, %v879, %v880
          %v882 = vrot.slane %v864, 2
          %v883 = vrot.slane %v865, 2
          %v884 = vsel %vm702, %v882, %v883
          %v885 = vrot.slane %v849, 2
          %v886 = vrot.slane %v850, 2
          %v887 = vsel %vm702, %v885, %v886
          %v888 = vrot.slane %v861, 2
          %v889 = vsel %vm702, %v880, %v888
          %v890 = vrot.slane %v866, 2
          %v891 = vsel %vm702, %v883, %v890
          %v892 = vrot.slane %v851, 2
          %v893 = vsel %vm702, %v886, %v892
          %v894 = vrot.slane %v862, 2
          %v895 = vsel %vm702, %v888, %v894
          %v896 = vrot.slane %v867, 2
          %v897 = vsel %vm702, %v890, %v896
          %v898 = vrot.slane %v852, 2
          %v899 = vsel %vm702, %v892, %v898
          %v900 = vrot.slane %v863, 2
          %v901 = vsel %vm702, %v894, %v900
          %v902 = vrot.slane %v868, 2
          %v903 = vsel %vm702, %v896, %v902
          %v904 = vrot.slane %v853, 2
          %v905 = vsel %vm702, %v898, %v904
          %v918 = vld [vmem:[#allocation7] sm:$0xff]
          %v919 = vld [vmem:[#allocation7 + $0x8] sm:$0xff]
          %v920 = vld [vmem:[#allocation7 + $0x10] sm:$0xff]
          %v921 = vld [vmem:[#allocation7 + $0x18] sm:$0xff]
          %v922 = vld [vmem:[#allocation7 + $0x20] sm:$0xff]
          %v923 = vld [vmem:[#allocation7 + $0x28] sm:$0xff]
          %v924 = vld [vmem:[#allocation7 + $0x30] sm:$0xff]
          %v925 = vld [vmem:[#allocation7 + $0x38] sm:$0xff]
          %v926 = vld [vmem:[#allocation7 + $0x40] sm:$0xff]
          %v927 = vld [vmem:[#allocation7 + $0x48] sm:$0xff]
          %v928 = vld [vmem:[#allocation7 + $0x50] sm:$0xff]
          %v929 = vld [vmem:[#allocation7 + $0x58] sm:$0xff]
          %v930 = vld [vmem:[#allocation7 + $0x60] sm:$0xff]
          %v931 = vld [vmem:[#allocation7 + $0x68] sm:$0xff]
          %v932 = vld [vmem:[#allocation7 + $0x70] sm:$0xff]
          %v933 = vld [vmem:[#allocation7 + $0x78] sm:$0xff]
          %v934 = vld [vmem:[#allocation7 + $0x80] sm:$0xff]
          %v935 = vld [vmem:[#allocation7 + $0x88] sm:$0xff]
          %v936 = vld [vmem:[#allocation7 + $0x90] sm:$0xff]
          %v937 = vld [vmem:[#allocation7 + $0x98] sm:$0xff]
          %v938 = vld [vmem:[#allocation7 + $0xa0] sm:$0xff]
          %v939 = vld [vmem:[#allocation7 + $0xa8] sm:$0xff]
          %v940 = vld [vmem:[#allocation7 + $0xb0] sm:$0xff]
          %v941 = vld [vmem:[#allocation7 + $0xb8] sm:$0xff]
          %v942 = vld [vmem:[#allocation7 + $0xc0] sm:$0xff]
          %v943 = vld [vmem:[#allocation7 + $0xc8] sm:$0xff]
          %v944 = vld [vmem:[#allocation7 + $0xd0] sm:$0xff]
          %v945 = vld [vmem:[#allocation7 + $0xd8] sm:$0xff]
          %v946 = vld [vmem:[#allocation7 + $0xe0] sm:$0xff]
          %v947 = vld [vmem:[#allocation7 + $0xe8] sm:$0xff]
          %v948 = vld [vmem:[#allocation7 + $0xf0] sm:$0xff]
          %v949 = vld [vmem:[#allocation7 + $0xf8] sm:$0xff]
          %v950 = vld [vmem:[#allocation7 + $0x100] sm:$0xff]
          %v951 = vld [vmem:[#allocation7 + $0x108] sm:$0xff]
          %v952 = vld [vmem:[#allocation7 + $0x110] sm:$0xff]
          %v953 = vld [vmem:[#allocation7 + $0x118] sm:$0xff]
          %v954 = vld [vmem:[#allocation7 + $0x120] sm:$0xff]
          %v955 = vld [vmem:[#allocation7 + $0x128] sm:$0xff]
          %v956 = vld [vmem:[#allocation7 + $0x130] sm:$0xff]
          %v957 = vld [vmem:[#allocation7 + $0x138] sm:$0xff]
          %v958 = vld [vmem:[#allocation7 + $0x140] sm:$0xff]
          %v959 = vld [vmem:[#allocation7 + $0x148] sm:$0xff]
          %v960 = vld [vmem:[#allocation7 + $0x150] sm:$0xff]
          %v961 = vld [vmem:[#allocation7 + $0x158] sm:$0xff]
          %v962 = vld [vmem:[#allocation7 + $0x160] sm:$0xff]
          %v963 = vld [vmem:[#allocation7 + $0x168] sm:$0xff]
          %v964 = vld [vmem:[#allocation7 + $0x170] sm:$0xff]
          %v965 = vld [vmem:[#allocation7 + $0x178] sm:$0xff]
          %v966 = vld [vmem:[#allocation7 + $0x180] sm:$0xff]
          %v967 = vld [vmem:[#allocation7 + $0x188] sm:$0xff]
          %v968 = vld [vmem:[#allocation7 + $0x190] sm:$0xff]
          %v969 = vld [vmem:[#allocation7 + $0x198] sm:$0xff]
          %v970 = vld [vmem:[#allocation7 + $0x1a0] sm:$0xff]
          %v971 = vld [vmem:[#allocation7 + $0x1a8] sm:$0xff]
          %v972 = vld [vmem:[#allocation7 + $0x1b0] sm:$0xff]
          %v973 = vld [vmem:[#allocation7 + $0x1b8] sm:$0xff]
          %v974 = vld [vmem:[#allocation7 + $0x1c0] sm:$0xff]
          %v975 = vld [vmem:[#allocation7 + $0x1c8] sm:$0xff]
          %v976 = vld [vmem:[#allocation7 + $0x1d0] sm:$0xff]
          %v977 = vld [vmem:[#allocation7 + $0x1d8] sm:$0xff]
          %v978 = vld [vmem:[#allocation7 + $0x1e0] sm:$0xff]
          %v979 = vld [vmem:[#allocation7 + $0x1e8] sm:$0xff]
          %v980 = vld [vmem:[#allocation7 + $0x1f0] sm:$0xff]
          %v981 = vld [vmem:[#allocation7 + $0x1f8] sm:$0xff]
          %v982 = vld [vmem:[#allocation7 + $0x200] sm:$0xff]
          %v983 = vld [vmem:[#allocation7 + $0x208] sm:$0xff]
          %v984 = vld [vmem:[#allocation7 + $0x210] sm:$0xff]
          %v985 = vld [vmem:[#allocation7 + $0x218] sm:$0xff]
          %v986 = vld [vmem:[#allocation7 + $0x220] sm:$0xff]
          %v987 = vld [vmem:[#allocation7 + $0x228] sm:$0xff]
          %v988 = vld [vmem:[#allocation7 + $0x230] sm:$0xff]
          %v989 = vld [vmem:[#allocation7 + $0x238] sm:$0xff]
          %v990 = vld [vmem:[#allocation7 + $0x240] sm:$0xff]
          %v991 = vld [vmem:[#allocation7 + $0x248] sm:$0xff]
          %v992 = vld [vmem:[#allocation7 + $0x250] sm:$0xff]
          %v993 = vld [vmem:[#allocation7 + $0x258] sm:$0xff]
          %v994 = vld [vmem:[#allocation7 + $0x260] sm:$0xff]
          %v995 = vld [vmem:[#allocation7 + $0x268] sm:$0xff]
          %v996 = vld [vmem:[#allocation7 + $0x270] sm:$0xff]
          %v997 = vld [vmem:[#allocation7 + $0x278] sm:$0xff]
          %v998 = vld [vmem:[#allocation7 + $0x280] sm:$0xff]
          %v999 = vld [vmem:[#allocation7 + $0x288] sm:$0xff]
          %v1000 = vld [vmem:[#allocation7 + $0x290] sm:$0xff]
          %v1001 = vld [vmem:[#allocation7 + $0x298] sm:$0xff]
          %v1002 = vld [vmem:[#allocation7 + $0x2a0] sm:$0xff]
          %v1003 = vld [vmem:[#allocation7 + $0x2a8] sm:$0xff]
          %v1004 = vld [vmem:[#allocation7 + $0x2b0] sm:$0xff]
          %v1005 = vld [vmem:[#allocation7 + $0x2b8] sm:$0xff]
          %v1006 = vld [vmem:[#allocation7 + $0x2c0] sm:$0xff]
          %v1007 = vld [vmem:[#allocation7 + $0x2c8] sm:$0xff]
          %v1008 = vld [vmem:[#allocation7 + $0x2d0] sm:$0xff]
          %v1009 = vld [vmem:[#allocation7 + $0x2d8] sm:$0xff]
          %v1010 = vld [vmem:[#allocation7 + $0x2e0] sm:$0xff]
          %v1011 = vld [vmem:[#allocation7 + $0x2e8] sm:$0xff]
          %v1012 = vld [vmem:[#allocation7 + $0x2f0] sm:$0xff]
          %v1013 = vld [vmem:[#allocation7 + $0x2f8] sm:$0xff]
          %v1014 = vld [vmem:[#allocation7 + $0x300] sm:$0xff]
          %v1015 = vld [vmem:[#allocation7 + $0x308] sm:$0xff]
          %v1016 = vld [vmem:[#allocation7 + $0x310] sm:$0xff]
          %v1017 = vld [vmem:[#allocation7 + $0x318] sm:$0xff]
          %v1018 = vld [vmem:[#allocation7 + $0x320] sm:$0xff]
          %v1019 = vld [vmem:[#allocation7 + $0x328] sm:$0xff]
          %vm1020 = vcmask 195584
          %v1021 = vsel %vm1020, %v738, 0
          %v1023 = vsel %vm1020, %v739, 0
          %v1025 = vsel %vm1020, %v740, 0
          %v1027 = vsel %vm1020, %v741, 0
          %v1029 = vsel %vm1020, %v887, 0
          %v1031 = vsel %vm1020, %v893, 0
          %v1033 = vsel %vm1020, %v899, 0
          %v1035 = vsel %vm1020, %v905, 0
          %1037 = vmatprep.subr.mxu0 %v919
          %1038 = vmatpush1.msra.mxu0 %v918
          %1039 = vmatprep.subr.mxu0 %v921
          %1040 = vmatpush1.msra.mxu0 %v920
          %1041 = vmatprep.subr.mxu0 %v923
          %1042 = vmatpush1.msra.mxu0 %v922
          %1043 = vmatprep.subr.mxu0 %v925
          %1044 = vmatpush1.msra.mxu0 %v924
          %1045 = vmatprep.subr.mxu0 %v927
          %1046 = vmatpush1.msra.mxu0 %v926
          %1047 = vmatprep.subr.mxu0 %v929
          %1048 = vmatpush1.msra.mxu0 %v928
          %1049 = vmatprep.subr.mxu0 %v931
          %1050 = vmatpush1.msra.mxu0 %v930
          %1051 = vmatprep.subr.mxu0 %v933
          %1052 = vmatpush1.msra.mxu0 %v932
          %1053 = vmatprep.subr.mxu0 %v935
          %1054 = vmatpush1.msra.mxu0 %v934
          %1055 = vmatprep.subr.mxu0 %v937
          %1056 = vmatpush1.msra.mxu0 %v936
          %1057 = vmatprep.subr.mxu0 %v939
          %1058 = vmatpush1.msra.mxu0 %v938
          %1059 = vmatprep.subr.mxu0 %v941
          %1060 = vmatpush1.msra.mxu0 %v940
          %1061 = vmatprep.subr.mxu0 %v943
          %1062 = vmatpush1.msra.mxu0 %v942
          %1063 = vmatprep.subr.mxu0 %v945
          %1064 = vmatpush1.msra.mxu0 %v944
          %1065 = vmatprep.subr.mxu0 %v947
          %1066 = vmatpush1.msra.mxu0 %v946
          %1067 = vmatprep.subr.mxu0 %v949
          %1068 = vmatpush1.msra.mxu0 %v948
          %1069 = vmatprep.subr.mxu0 %v951
          %1070 = vmatpush1.msra.mxu0 %v950
          %1071 = vmatprep.subr.mxu0 %v953
          %1072 = vmatpush1.msra.mxu0 %v952
          %1073 = vmatprep.subr.mxu0 %v955
          %1074 = vmatpush1.msra.mxu0 %v954
          %1075 = vmatprep.subr.mxu0 %v957
          %1076 = vmatpush1.msra.mxu0 %v956
          %1077 = vmatprep.subr.mxu0 %v959
          %1078 = vmatpush1.msra.mxu0 %v958
          %1079 = vmatprep.subr.mxu0 %v961
          %1080 = vmatpush1.msra.mxu0 %v960
          %1081 = vmatprep.subr.mxu0 %v963
          %1082 = vmatpush1.msra.mxu0 %v962
          %1083 = vmatprep.subr.mxu0 %v965
          %1084 = vmatpush1.msra.mxu0 %v964
          %1085 = vmatprep.subr.mxu0 %v967
          %1086 = vmatpush1.msra.mxu0 %v966
          %1087 = vmatprep.subr.mxu0 %v969
          %1088 = vmatpush1.msra.mxu0 %v968
          %1089 = vmatprep.subr.mxu0 %v971
          %1090 = vmatpush1.msra.mxu0 %v970
          %1091 = vmatprep.subr.mxu0 %v973
          %1092 = vmatpush1.msra.mxu0 %v972
          %1093 = vmatprep.subr.mxu0 %v975
          %1094 = vmatpush1.msra.mxu0 %v974
          %1095 = vmatprep.subr.mxu0 %v977
          %1096 = vmatpush1.msra.mxu0 %v976
          %1097 = vmatprep.subr.mxu0 %v979
          %1098 = vmatpush1.msra.mxu0 %v978
          %1099 = vmatprep.subr.mxu0 %v981
          %1100 = vmatpush1.msra.mxu0 %v980
          %1101 = vmatprep.mubr.f32.mxu0 %v746
          %1102 = vmatmul.mubr.f32.gmra.mrb[0].mxu0 %v592
          %v1103 = vpop.f32.mrb[0].mxu0
          %v1104 = vadd.f32 0.0, %v1103
          %v1105 = vpop.f32.mrb[0].mxu0
          %v1106 = vadd.f32 0.0, %v1105
          %1107 = vmatprep.mubr.f32.mxu0 %v747
          %1108 = vmatmul.mubr.f32.gmra.mrb[0].mxu0 %v598
          %v1109 = vpop.f32.mrb[0].mxu0
          %v1110 = vadd.f32 0.0, %v1109
          %v1111 = vpop.f32.mrb[0].mxu0
          %v1112 = vadd.f32 0.0, %v1111
          %1113 = vmatprep.mubr.f32.mxu0 %v748
          %1114 = vmatmul.mubr.f32.gmra.mrb[0].mxu0 %v604
          %v1115 = vpop.f32.mrb[0].mxu0
          %v1116 = vadd.f32 0.0, %v1115
          %v1117 = vpop.f32.mrb[0].mxu0
          %v1118 = vadd.f32 0.0, %v1117
          %1119 = vmatprep.mubr.f32.mxu0 %v749
          %1120 = vmatmul.mubr.f32.gmra.mrb[0].mxu0 %v610
          %v1121 = vpop.f32.mrb[0].mxu0
          %v1122 = vadd.f32 0.0, %v1121
          %v1123 = vpop.f32.mrb[0].mxu0
          %v1124 = vadd.f32 0.0, %v1123
          %1125 = vmatprep.mubr.f32.mxu0 %v881
          %1126 = vmatmul.mubr.f32.gmra.mrb[0].mxu0 %v814
          %v1127 = vpop.f32.mrb[0].mxu0
          %v1128 = vadd.f32 0.0, %v1127
          %v1129 = vpop.f32.mrb[0].mxu0
          %v1130 = vadd.f32 0.0, %v1129
          %1131 = vmatprep.mubr.f32.mxu0 %v889
          %1132 = vmatmul.mubr.f32.gmra.mrb[0].mxu0 %v818
          %v1133 = vpop.f32.mrb[0].mxu0
          %v1134 = vadd.f32 0.0, %v1133
          %v1135 = vpop.f32.mrb[0].mxu0
          %v1136 = vadd.f32 0.0, %v1135
          %1137 = vmatprep.mubr.f32.mxu0 %v895
          %1138 = vmatmul.mubr.f32.gmra.mrb[0].mxu0 %v822
          %v1139 = vpop.f32.mrb[0].mxu0
          %v1140 = vadd.f32 0.0, %v1139
          %v1141 = vpop.f32.mrb[0].mxu0
          %v1142 = vadd.f32 0.0, %v1141
          %1143 = vmatprep.mubr.f32.mxu0 %v901
          %1144 = vmatmul.mubr.f32.gmra.mrb[0].mxu0 %v826
          %v1145 = vpop.f32.mrb[0].mxu0
          %v1146 = vadd.f32 0.0, %v1145
          %v1147 = vpop.f32.mrb[0].mxu0
          %v1148 = vadd.f32 0.0, %v1147
          %1149 = vdwg.mxu0
          %1150 = vmatprep.subr.mxu0 %v983
          %1151 = vmatpush1.msra.mxu0 %v982
          %1152 = vmatprep.subr.mxu0 %v985
          %1153 = vmatpush1.msra.mxu0 %v984
          %1154 = vmatprep.subr.mxu0 %v987
          %1155 = vmatpush1.msra.mxu0 %v986
          %1156 = vmatprep.subr.mxu0 %v989
          %1157 = vmatpush1.msra.mxu0 %v988
          %1158 = vmatprep.subr.mxu0 %v991
          %1159 = vmatpush1.msra.mxu0 %v990
          %1160 = vmatprep.subr.mxu0 %v993
          %1161 = vmatpush1.msra.mxu0 %v992
          %1162 = vmatprep.subr.mxu0 %v995
          %1163 = vmatpush1.msra.mxu0 %v994
          %1164 = vmatprep.subr.mxu0 %v997
          %1165 = vmatpush1.msra.mxu0 %v996
          %1166 = vmatprep.subr.mxu0 %v999
          %1167 = vmatpush1.msra.mxu0 %v998
          %1168 = vmatprep.subr.mxu0 %v1001
          %1169 = vmatpush1.msra.mxu0 %v1000
          %1170 = vmatprep.subr.mxu0 %v1003
          %1171 = vmatpush1.msra.mxu0 %v1002
          %1172 = vmatprep.subr.mxu0 %v1005
          %1173 = vmatpush1.msra.mxu0 %v1004
          %1174 = vmatprep.subr.mxu0 %v1007
          %1175 = vmatpush1.msra.mxu0 %v1006
          %1176 = vmatprep.subr.mxu0 %v1009
          %1177 = vmatpush1.msra.mxu0 %v1008
          %1178 = vmatprep.subr.mxu0 %v1011
          %1179 = vmatpush1.msra.mxu0 %v1010
          %1180 = vmatprep.subr.mxu0 %v1013
          %1181 = vmatpush1.msra.mxu0 %v1012
          %1182 = vmatprep.subr.mxu0 %v1015
          %1183 = vmatpush1.msra.mxu0 %v1014
          %1184 = vmatprep.subr.mxu0 %v1017
          %1185 = vmatpush1.msra.mxu0 %v1016
          %1186 = vmatprep.subr.mxu0 %v1019
          %1187 = vmatpush1.msra.mxu0 %v1018
          %1188 = vmatprep.subr.mxu0 0.0
          %1189 = vmatpush1.msra.mxu0 0.0
          %1190 = vmatprep.subr.mxu0 0.0
          %1191 = vmatpush1.msra.mxu0 0.0
          %1192 = vmatprep.subr.mxu0 0.0
          %1193 = vmatpush1.msra.mxu0 0.0
          %1194 = vmatprep.subr.mxu0 0.0
          %1195 = vmatpush1.msra.mxu0 0.0
          %1196 = vmatprep.subr.mxu0 0.0
          %1197 = vmatpush1.msra.mxu0 0.0
          %1198 = vmatprep.subr.mxu0 0.0
          %1199 = vmatpush1.msra.mxu0 0.0
          %1200 = vmatprep.subr.mxu0 0.0
          %1201 = vmatpush1.msra.mxu0 0.0
          %1202 = vmatprep.subr.mxu0 0.0
          %1203 = vmatpush1.msra.mxu0 0.0
          %1204 = vmatprep.subr.mxu0 0.0
          %1205 = vmatpush1.msra.mxu0 0.0
          %1206 = vmatprep.subr.mxu0 0.0
          %1207 = vmatpush1.msra.mxu0 0.0
          %1208 = vmatprep.subr.mxu0 0.0
          %1209 = vmatpush1.msra.mxu0 0.0
          %1210 = vmatprep.subr.mxu0 0.0
          %1211 = vmatpush1.msra.mxu0 0.0
          %1212 = vmatprep.subr.mxu0 0.0
          %1213 = vmatpush1.msra.mxu0 0.0
          %1214 = vmatprep.mubr.f32.mxu0 %v1021
          %1215 = vmatmul.mubr.f32.gmra.mrb[0].mxu0 %v750
          %v1216 = vpop.f32.mrb[0].mxu0
          %v1217 = vadd.f32 %v1104, %v1216
          %v1218 = vpop.f32.mrb[0].mxu0
          %v1219 = vadd.f32 %v1106, %v1218
          %1220 = vmatprep.mubr.f32.mxu0 %v1023
          %1221 = vmatmul.mubr.f32.gmra.mrb[0].mxu0 %v751
          %v1222 = vpop.f32.mrb[0].mxu0
          %v1223 = vadd.f32 %v1110, %v1222
          %v1224 = vpop.f32.mrb[0].mxu0
          %v1225 = vadd.f32 %v1112, %v1224
          %1226 = vmatprep.mubr.f32.mxu0 %v1025
          %1227 = vmatmul.mubr.f32.gmra.mrb[0].mxu0 %v752
          %v1228 = vpop.f32.mrb[0].mxu0
          %v1229 = vadd.f32 %v1116, %v1228
          %v1230 = vpop.f32.mrb[0].mxu0
          %v1231 = vadd.f32 %v1118, %v1230
          %1232 = vmatprep.mubr.f32.mxu0 %v1027
          %1233 = vmatmul.mubr.f32.gmra.mrb[0].mxu0 %v753
          %v1234 = vpop.f32.mrb[0].mxu0
          %v1235 = vadd.f32 %v1122, %v1234
          %v1236 = vpop.f32.mrb[0].mxu0
          %v1237 = vadd.f32 %v1124, %v1236
          %1238 = vmatprep.mubr.f32.mxu0 %v1029
          %1239 = vmatmul.mubr.f32.gmra.mrb[0].mxu0 %v884
          %v1240 = vpop.f32.mrb[0].mxu0
          %v1241 = vadd.f32 %v1128, %v1240
          %v1242 = vpop.f32.mrb[0].mxu0
          %v1243 = vadd.f32 %v1130, %v1242
          %1244 = vmatprep.mubr.f32.mxu0 %v1031
          %1245 = vmatmul.mubr.f32.gmra.mrb[0].mxu0 %v891
          %v1246 = vpop.f32.mrb[0].mxu0
          %v1247 = vadd.f32 %v1134, %v1246
          %v1248 = vpop.f32.mrb[0].mxu0
          %v1249 = vadd.f32 %v1136, %v1248
          %1250 = vmatprep.mubr.f32.mxu0 %v1033
          %1251 = vmatmul.mubr.f32.gmra.mrb[0].mxu0 %v897
          %v1252 = vpop.f32.mrb[0].mxu0
          %v1253 = vadd.f32 %v1140, %v1252
          %v1254 = vpop.f32.mrb[0].mxu0
          %v1255 = vadd.f32 %v1142, %v1254
          %1256 = vmatprep.mubr.f32.mxu0 %v1035
          %1257 = vmatmul.mubr.f32.gmra.mrb[0].mxu0 %v903
          %v1258 = vpop.f32.mrb[0].mxu0
          %v1259 = vadd.f32 %v1146, %v1258
          %v1260 = vpop.f32.mrb[0].mxu0
          %v1261 = vadd.f32 %v1148, %v1260
          %1262 = vdwg.mxu0
          %s1263 = smul.u32 %s28, 64
          %s1264 = sshra.s32 %s1263, 3
          %s1265 = sand.u32 %s1263, 7
          %s1266 = smul.u32 %s1264, 2
          %s1267 = smul.addr %s1266, 8
          %s1268 = scalar_lea.vmem [#allocation2], %s1267
          %1269 = vst [vmem:[%s1268] sm:$0xff] %v1217
          %1270 = vst [vmem:[%s1268 + $0x8] sm:$0xff] %v1219
          %1271 = vst [vmem:[%s1268 + $0x10] sm:$0xff] %v1223
          %1272 = vst [vmem:[%s1268 + $0x18] sm:$0xff] %v1225
          %1273 = vst [vmem:[%s1268 + $0x20] sm:$0xff] %v1229
          %1274 = vst [vmem:[%s1268 + $0x28] sm:$0xff] %v1231
          %1275 = vst [vmem:[%s1268 + $0x30] sm:$0xff] %v1235
          %1276 = vst [vmem:[%s1268 + $0x38] sm:$0xff] %v1237
          %1277 = vst [vmem:[%s1268 + $0x40] sm:$0xff] %v1241
          %1278 = vst [vmem:[%s1268 + $0x48] sm:$0xff] %v1243
          %1279 = vst [vmem:[%s1268 + $0x50] sm:$0xff] %v1247
          %1280 = vst [vmem:[%s1268 + $0x58] sm:$0xff] %v1249
          %1281 = vst [vmem:[%s1268 + $0x60] sm:$0xff] %v1253
          %1282 = vst [vmem:[%s1268 + $0x68] sm:$0xff] %v1255
          %1283 = vst [vmem:[%s1268 + $0x70] sm:$0xff] %v1259
          %1284 = vst [vmem:[%s1268 + $0x78] sm:$0xff] %v1261
          %v1285 = vld [vmem:[#allocation3] sm:$0x3]
          %v1286 = vadd.f32 %v1217, %v1223
          %v1287 = vadd.f32 %v1286, %v1229
          %v1288 = vadd.f32 %v1287, %v1235
          %v1289 = vadd.f32 %v1288, %v1241
          %v1290 = vadd.f32 %v1289, %v1247
          %v1291 = vadd.f32 %v1290, %v1253
          %v1292 = vadd.f32 %v1291, %v1259
          %v1293 = vrot.slane %v1292, 4
          %v1294 = vadd.f32 %v1292, %v1293
          %v1295 = vrot.slane %v1294, 2
          %v1296 = vadd.f32 %v1294, %v1295
          %v1297 = vrot.slane %v1296, 1
          %v1298 = vadd.f32 %v1296, %v1297
          %v1299 = vadd.f32 %v1219, %v1225
          %v1300 = vadd.f32 %v1299, %v1231
          %v1301 = vadd.f32 %v1300, %v1237
          %v1302 = vadd.f32 %v1301, %v1243
          %v1303 = vadd.f32 %v1302, %v1249
          %v1304 = vadd.f32 %v1303, %v1255
          %v1305 = vadd.f32 %v1304, %v1261
          %v1306 = vrot.slane %v1305, 4
          %v1307 = vadd.f32 %v1305, %v1306
          %v1308 = vrot.slane %v1307, 2
          %v1309 = vadd.f32 %v1307, %v1308
          %v1310 = vrot.slane %v1309, 1
          %v1311 = vadd.f32 %v1309, %v1310
          %v1314 = vcombine.low %v1298, %v1311
          %v1316 = vunpack.c.l.s4 1966171168
          %v1317 = vunpack.c.0.s8 %v1316
          %v1318 = vlaneseq
          %v1319 = vshrl.u32 %v1318, 7
          %v1320 = vsub.s32 %v1317, %v1319
          %v1321 = vrot.slane %v1314, %v1320
          %v1323 = vunpack.c.l.s4 1966171168
          %v1324 = vunpack.c.0.s8 %v1323
          %v1325 = vlaneseq
          %v1326 = vshrl.u32 %v1325, 7
          %v1327 = vsub.s32 %v1324, %v1326
          %v1328 = vrot.slane %v1321, %v1327
          %v1330 = vadd.f32 %v1285, %v1328
          %v1331 = vlaneseq
          %vm1332 = vcmp.ge.s32.totalorder %v1331, 0
          %vm1333 = vcmp.lt.s32.totalorder %v1331, 256
          %vm1334 = vmand %vm1332, %vm1333
          %1335 = vst.msk [vmem:[#allocation3] sm:$0x3] %vm1334, %v1330
          %v1336 = vld [vmem:[#allocation4] sm:$0x3]
          %v1337 = vmul.f32 %v1217, %v1217
          %v1338 = vmul.f32 %v1219, %v1219
          %v1339 = vmul.f32 %v1223, %v1223
          %v1340 = vmul.f32 %v1225, %v1225
          %v1341 = vmul.f32 %v1229, %v1229
          %v1342 = vmul.f32 %v1231, %v1231
          %v1343 = vmul.f32 %v1235, %v1235
          %v1344 = vmul.f32 %v1237, %v1237
          %v1345 = vmul.f32 %v1241, %v1241
          %v1346 = vmul.f32 %v1243, %v1243
          %v1347 = vmul.f32 %v1247, %v1247
          %v1348 = vmul.f32 %v1249, %v1249
          %v1349 = vmul.f32 %v1253, %v1253
          %v1350 = vmul.f32 %v1255, %v1255
          %v1351 = vmul.f32 %v1259, %v1259
          %v1352 = vmul.f32 %v1261, %v1261
          %v1353 = vadd.f32 %v1337, %v1339
          %v1354 = vadd.f32 %v1353, %v1341
          %v1355 = vadd.f32 %v1354, %v1343
          %v1356 = vadd.f32 %v1355, %v1345
          %v1357 = vadd.f32 %v1356, %v1347
          %v1358 = vadd.f32 %v1357, %v1349
          %v1359 = vadd.f32 %v1358, %v1351
          %v1360 = vrot.slane %v1359, 4
          %v1361 = vadd.f32 %v1359, %v1360
          %v1362 = vrot.slane %v1361, 2
          %v1363 = vadd.f32 %v1361, %v1362
          %v1364 = vrot.slane %v1363, 1
          %v1365 = vadd.f32 %v1363, %v1364
          %v1366 = vadd.f32 %v1338, %v1340
          %v1367 = vadd.f32 %v1366, %v1342
          %v1368 = vadd.f32 %v1367, %v1344
          %v1369 = vadd.f32 %v1368, %v1346
          %v1370 = vadd.f32 %v1369, %v1348
          %v1371 = vadd.f32 %v1370, %v1350
          %v1372 = vadd.f32 %v1371, %v1352
          %v1373 = vrot.slane %v1372, 4
          %v1374 = vadd.f32 %v1372, %v1373
          %v1375 = vrot.slane %v1374, 2
          %v1376 = vadd.f32 %v1374, %v1375
          %v1377 = vrot.slane %v1376, 1
          %v1378 = vadd.f32 %v1376, %v1377
          %v1381 = vcombine.low %v1365, %v1378
          %v1383 = vunpack.c.l.s4 1966171168
          %v1384 = vunpack.c.0.s8 %v1383
          %v1385 = vlaneseq
          %v1386 = vshrl.u32 %v1385, 7
          %v1387 = vsub.s32 %v1384, %v1386
          %v1388 = vrot.slane %v1381, %v1387
          %v1390 = vunpack.c.l.s4 1966171168
          %v1391 = vunpack.c.0.s8 %v1390
          %v1392 = vlaneseq
          %v1393 = vshrl.u32 %v1392, 7
          %v1394 = vsub.s32 %v1391, %v1393
          %v1395 = vrot.slane %v1388, %v1394
          %v1397 = vadd.f32 %v1336, %v1395
          %1398 = vst.msk [vmem:[#allocation4] sm:$0x3] %vm1334, %v1397
        $region64: #{tpu_custom_call.1} parent=51 // pred_fallthru
          _
        %p1399 = scmp.eq.s32.totalorder %s27, 1
        %p1400 = pnand %p1399, %p352
        %p1401 = pneg %p1400
        // Predicated region
        $region65: #{tpu_custom_call.1} parent=51 // pred_check
          _
        $region66: #{tpu_custom_call.1} parent=51 // pred_check_branch
          %1403 = sbr.rel (%p1400) target = $region68
        $region67: #{tpu_custom_call.1} parent=51 // pred_region
          %v1404 = vld [vmem:[#allocation3] sm:$0x3]
          %v1405 = vld [vmem:[%s4] sm:$0xff]
          %v1406 = vld [vmem:[%s4 + $0x8] sm:$0xff]
          %v1407 = vld [vmem:[%s4 + $0x10] sm:$0xff]
          %v1408 = vld [vmem:[%s4 + $0x18] sm:$0xff]
          %v1409 = vld [vmem:[%s4 + $0x20] sm:$0xff]
          %v1410 = vld [vmem:[%s4 + $0x28] sm:$0xff]
          %v1411 = vld [vmem:[%s4 + $0x30] sm:$0xff]
          %v1412 = vld [vmem:[%s4 + $0x38] sm:$0xff]
          %v1413 = vld [vmem:[%s4 + $0x40] sm:$0xff]
          %v1414 = vld [vmem:[%s4 + $0x48] sm:$0xff]
          %v1415 = vld [vmem:[%s4 + $0x50] sm:$0xff]
          %v1416 = vld [vmem:[%s4 + $0x58] sm:$0xff]
          %v1417 = vld [vmem:[%s4 + $0x60] sm:$0xff]
          %v1418 = vld [vmem:[%s4 + $0x68] sm:$0xff]
          %v1419 = vld [vmem:[%s4 + $0x70] sm:$0xff]
          %v1420 = vld [vmem:[%s4 + $0x78] sm:$0xff]
          %v1421 = vld [vmem:[%s4 + $0x80] sm:$0xff]
          %v1422 = vld [vmem:[%s4 + $0x88] sm:$0xff]
          %v1423 = vld [vmem:[%s4 + $0x90] sm:$0xff]
          %v1424 = vld [vmem:[%s4 + $0x98] sm:$0xff]
          %v1425 = vld [vmem:[%s4 + $0xa0] sm:$0xff]
          %v1426 = vld [vmem:[%s4 + $0xa8] sm:$0xff]
          %v1427 = vld [vmem:[%s4 + $0xb0] sm:$0xff]
          %v1428 = vld [vmem:[%s4 + $0xb8] sm:$0xff]
          %v1429 = vld [vmem:[%s4 + $0xc0] sm:$0xff]
          %v1430 = vld [vmem:[%s4 + $0xc8] sm:$0xff]
          %v1431 = vld [vmem:[%s4 + $0xd0] sm:$0xff]
          %v1432 = vld [vmem:[%s4 + $0xd8] sm:$0xff]
          %v1433 = vld [vmem:[%s4 + $0xe0] sm:$0xff]
          %v1434 = vld [vmem:[%s4 + $0xe8] sm:$0xff]
          %v1435 = vld [vmem:[%s4 + $0xf0] sm:$0xff]
          %v1436 = vld [vmem:[%s4 + $0xf8] sm:$0xff]
          %v1438 = vlaneseq
          %v1439 = vshrl.u32 %v1438, 7
          %v1440 = vsub.s32 0, %v1439
          %v1441 = vrot.slane %v1404, %v1440
          %v1442 = vlaneseq
          %v1443 = vshrl.u32 %v1442, 7
          %v1444 = vsub.s32 1, %v1443
          %v1445 = vrot.slane %v1404, %v1444
          %1448 = vmatprep.subr.mxu0 0.0
          %1449 = vmatpush1.msra.mxu0 %v1405
          %1450 = vmatprep.subr.mxu0 0.0
          %1451 = vmatpush1.msra.mxu0 %v1406
          %1452 = vmatprep.subr.mxu0 0.0
          %1453 = vmatpush1.msra.mxu0 %v1407
          %1454 = vmatprep.subr.mxu0 0.0
          %1455 = vmatpush1.msra.mxu0 %v1408
          %1456 = vmatprep.subr.mxu0 0.0
          %1457 = vmatpush1.msra.mxu0 %v1409
          %1458 = vmatprep.subr.mxu0 0.0
          %1459 = vmatpush1.msra.mxu0 %v1410
          %1460 = vmatprep.subr.mxu0 0.0
          %1461 = vmatpush1.msra.mxu0 %v1411
          %1462 = vmatprep.subr.mxu0 0.0
          %1463 = vmatpush1.msra.mxu0 %v1412
          %1464 = vmatprep.subr.mxu0 0.0
          %1465 = vmatpush1.msra.mxu0 %v1413
          %1466 = vmatprep.subr.mxu0 0.0
          %1467 = vmatpush1.msra.mxu0 %v1414
          %1468 = vmatprep.subr.mxu0 0.0
          %1469 = vmatpush1.msra.mxu0 %v1415
          %1470 = vmatprep.subr.mxu0 0.0
          %1471 = vmatpush1.msra.mxu0 %v1416
          %1472 = vmatprep.subr.mxu0 0.0
          %1473 = vmatpush1.msra.mxu0 %v1417
          %1474 = vmatprep.subr.mxu0 0.0
          %1475 = vmatpush1.msra.mxu0 %v1418
          %1476 = vmatprep.subr.mxu0 0.0
          %1477 = vmatpush1.msra.mxu0 %v1419
          %1478 = vmatprep.subr.mxu0 0.0
          %1479 = vmatpush1.msra.mxu0 %v1420
          %1480 = vmatprep.subr.mxu0 0.0
          %1481 = vmatpush1.msra.mxu0 %v1421
          %1482 = vmatprep.subr.mxu0 0.0
          %1483 = vmatpush1.msra.mxu0 %v1422
          %1484 = vmatprep.subr.mxu0 0.0
          %1485 = vmatpush1.msra.mxu0 %v1423
          %1486 = vmatprep.subr.mxu0 0.0
          %1487 = vmatpush1.msra.mxu0 %v1424
          %1488 = vmatprep.subr.mxu0 0.0
          %1489 = vmatpush1.msra.mxu0 %v1425
          %1490 = vmatprep.subr.mxu0 0.0
          %1491 = vmatpush1.msra.mxu0 %v1426
          %1492 = vmatprep.subr.mxu0 0.0
          %1493 = vmatpush1.msra.mxu0 %v1427
          %1494 = vmatprep.subr.mxu0 0.0
          %1495 = vmatpush1.msra.mxu0 %v1428
          %1496 = vmatprep.subr.mxu0 0.0
          %1497 = vmatpush1.msra.mxu0 %v1429
          %1498 = vmatprep.subr.mxu0 0.0
          %1499 = vmatpush1.msra.mxu0 %v1430
          %1500 = vmatprep.subr.mxu0 0.0
          %1501 = vmatpush1.msra.mxu0 %v1431
          %1502 = vmatprep.subr.mxu0 0.0
          %1503 = vmatpush1.msra.mxu0 %v1432
          %1504 = vmatprep.subr.mxu0 0.0
          %1505 = vmatpush1.msra.mxu0 %v1433
          %1506 = vmatprep.subr.mxu0 0.0
          %1507 = vmatpush1.msra.mxu0 %v1434
          %1508 = vmatprep.subr.mxu0 0.0
          %1509 = vmatpush1.msra.mxu0 %v1435
          %1510 = vmatprep.subr.mxu0 0.0
          %1511 = vmatpush1.msra.mxu0 %v1436
          %1512 = vmatprep.mubr.f32.mxu0 %v1445
          %1513 = vmatmul.mubr.f32.gmra.mrb[0].mxu0 %v1441
          %v1514 = vpop.f32.mrb[0].mxu0
          %v1515 = vadd.f32 0.0, %v1514
          %v1516 = vpop.f32.mrb[0].mxu0
          %1517 = vdwg.mxu0
          %v1518 = vld [vmem:[#allocation4] sm:$0x3]
          %v1520 = vlaneseq
          %v1521 = vshrl.u32 %v1520, 7
          %v1522 = vsub.s32 0, %v1521
          %v1523 = vrot.slane %v1518, %v1522
          %v1524 = vlaneseq
          %v1525 = vshrl.u32 %v1524, 7
          %v1526 = vsub.s32 1, %v1525
          %v1527 = vrot.slane %v1518, %v1526
          %1530 = vmatprep.subr.mxu0 0.0
          %1531 = vmatpush1.msra.mxu0 %v1405
          %1532 = vmatprep.subr.mxu0 0.0
          %1533 = vmatpush1.msra.mxu0 %v1406
          %1534 = vmatprep.subr.mxu0 0.0
          %1535 = vmatpush1.msra.mxu0 %v1407
          %1536 = vmatprep.subr.mxu0 0.0
          %1537 = vmatpush1.msra.mxu0 %v1408
          %1538 = vmatprep.subr.mxu0 0.0
          %1539 = vmatpush1.msra.mxu0 %v1409
          %1540 = vmatprep.subr.mxu0 0.0
          %1541 = vmatpush1.msra.mxu0 %v1410
          %1542 = vmatprep.subr.mxu0 0.0
          %1543 = vmatpush1.msra.mxu0 %v1411
          %1544 = vmatprep.subr.mxu0 0.0
          %1545 = vmatpush1.msra.mxu0 %v1412
          %1546 = vmatprep.subr.mxu0 0.0
          %1547 = vmatpush1.msra.mxu0 %v1413
          %1548 = vmatprep.subr.mxu0 0.0
          %1549 = vmatpush1.msra.mxu0 %v1414
          %1550 = vmatprep.subr.mxu0 0.0
          %1551 = vmatpush1.msra.mxu0 %v1415
          %1552 = vmatprep.subr.mxu0 0.0
          %1553 = vmatpush1.msra.mxu0 %v1416
          %1554 = vmatprep.subr.mxu0 0.0
          %1555 = vmatpush1.msra.mxu0 %v1417
          %1556 = vmatprep.subr.mxu0 0.0
          %1557 = vmatpush1.msra.mxu0 %v1418
          %1558 = vmatprep.subr.mxu0 0.0
          %1559 = vmatpush1.msra.mxu0 %v1419
          %1560 = vmatprep.subr.mxu0 0.0
          %1561 = vmatpush1.msra.mxu0 %v1420
          %1562 = vmatprep.subr.mxu0 0.0
          %1563 = vmatpush1.msra.mxu0 %v1421
          %1564 = vmatprep.subr.mxu0 0.0
          %1565 = vmatpush1.msra.mxu0 %v1422
          %1566 = vmatprep.subr.mxu0 0.0
          %1567 = vmatpush1.msra.mxu0 %v1423
          %1568 = vmatprep.subr.mxu0 0.0
          %1569 = vmatpush1.msra.mxu0 %v1424
          %1570 = vmatprep.subr.mxu0 0.0
          %1571 = vmatpush1.msra.mxu0 %v1425
          %1572 = vmatprep.subr.mxu0 0.0
          %1573 = vmatpush1.msra.mxu0 %v1426
          %1574 = vmatprep.subr.mxu0 0.0
          %1575 = vmatpush1.msra.mxu0 %v1427
          %1576 = vmatprep.subr.mxu0 0.0
          %1577 = vmatpush1.msra.mxu0 %v1428
          %1578 = vmatprep.subr.mxu0 0.0
          %1579 = vmatpush1.msra.mxu0 %v1429
          %1580 = vmatprep.subr.mxu0 0.0
          %1581 = vmatpush1.msra.mxu0 %v1430
          %1582 = vmatprep.subr.mxu0 0.0
          %1583 = vmatpush1.msra.mxu0 %v1431
          %1584 = vmatprep.subr.mxu0 0.0
          %1585 = vmatpush1.msra.mxu0 %v1432
          %1586 = vmatprep.subr.mxu0 0.0
          %1587 = vmatpush1.msra.mxu0 %v1433
          %1588 = vmatprep.subr.mxu0 0.0
          %1589 = vmatpush1.msra.mxu0 %v1434
          %1590 = vmatprep.subr.mxu0 0.0
          %1591 = vmatpush1.msra.mxu0 %v1435
          %1592 = vmatprep.subr.mxu0 0.0
          %1593 = vmatpush1.msra.mxu0 %v1436
          %1594 = vmatprep.mubr.f32.mxu0 %v1527
          %1595 = vmatmul.mubr.f32.gmra.mrb[0].mxu0 %v1523
          %v1596 = vpop.f32.mrb[0].mxu0
          %v1597 = vadd.f32 0.0, %v1596
          %v1598 = vpop.f32.mrb[0].mxu0
          %1599 = vdwg.mxu0
          %v1600 = vmul.f32 %v1515, 0.00048828125
          %v1601 = vmul.f32 %v1597, 0.00048828125
          %v1602 = vmul.f32 %v1600, %v1600
          %v1603 = vsub.f32 %v1601, %v1602
          %v1604 = vld [vmem:[%s6] sm:$0x1]
          %v1605 = vadd.f32 %v1603, 1e-05
          %v1606 = vrsqrt.pop %v1605
          %v1607 = vmul.f32 %v1604, %v1606
          %v1608 = vld [vmem:[%s7] sm:$0x1]
          %v1609 = vmul.f32 %v1600, %v1607
          %v1610 = vsub.f32 %v1608, %v1609
          %v1611 = vld [vmem:[%s5] sm:$0xff]
          %v1612 = vld [vmem:[%s5 + $0x8] sm:$0xff]
          %vm1613 = vcmask 64512
          %v1615 = vsel %vm1613, %v1607, 0
          %1617 = vmatprep.subr.mxu0 %v1612
          %1618 = vmatpush1.msra.mxu0 %v1611
          %1619 = vmatprep.subr.mxu0 0.0
          %1620 = vmatpush1.msra.mxu0 0.0
          %1621 = vmatprep.subr.mxu0 0.0
          %1622 = vmatpush1.msra.mxu0 0.0
          %1623 = vmatprep.subr.mxu0 0.0
          %1624 = vmatpush1.msra.mxu0 0.0
          %1625 = vmatprep.subr.mxu0 0.0
          %1626 = vmatpush1.msra.mxu0 0.0
          %1627 = vmatprep.subr.mxu0 0.0
          %1628 = vmatpush1.msra.mxu0 0.0
          %1629 = vmatprep.subr.mxu0 0.0
          %1630 = vmatpush1.msra.mxu0 0.0
          %1631 = vmatprep.subr.mxu0 0.0
          %1632 = vmatpush1.msra.mxu0 0.0
          %1633 = vmatprep.subr.mxu0 0.0
          %1634 = vmatpush1.msra.mxu0 0.0
          %1635 = vmatprep.subr.mxu0 0.0
          %1636 = vmatpush1.msra.mxu0 0.0
          %1637 = vmatprep.subr.mxu0 0.0
          %1638 = vmatpush1.msra.mxu0 0.0
          %1639 = vmatprep.subr.mxu0 0.0
          %1640 = vmatpush1.msra.mxu0 0.0
          %1641 = vmatprep.subr.mxu0 0.0
          %1642 = vmatpush1.msra.mxu0 0.0
          %1643 = vmatprep.subr.mxu0 0.0
          %1644 = vmatpush1.msra.mxu0 0.0
          %1645 = vmatprep.subr.mxu0 0.0
          %1646 = vmatpush1.msra.mxu0 0.0
          %1647 = vmatprep.subr.mxu0 0.0
          %1648 = vmatpush1.msra.mxu0 0.0
          %1649 = vmatprep.subr.mxu0 0.0
          %1650 = vmatpush1.msra.mxu0 0.0
          %1651 = vmatprep.subr.mxu0 0.0
          %1652 = vmatpush1.msra.mxu0 0.0
          %1653 = vmatprep.subr.mxu0 0.0
          %1654 = vmatpush1.msra.mxu0 0.0
          %1655 = vmatprep.subr.mxu0 0.0
          %1656 = vmatpush1.msra.mxu0 0.0
          %1657 = vmatprep.subr.mxu0 0.0
          %1658 = vmatpush1.msra.mxu0 0.0
          %1659 = vmatprep.subr.mxu0 0.0
          %1660 = vmatpush1.msra.mxu0 0.0
          %1661 = vmatprep.subr.mxu0 0.0
          %1662 = vmatpush1.msra.mxu0 0.0
          %1663 = vmatprep.subr.mxu0 0.0
          %1664 = vmatpush1.msra.mxu0 0.0
          %1665 = vmatprep.subr.mxu0 0.0
          %1666 = vmatpush1.msra.mxu0 0.0
          %1667 = vmatprep.subr.mxu0 0.0
          %1668 = vmatpush1.msra.mxu0 0.0
          %1669 = vmatprep.subr.mxu0 0.0
          %1670 = vmatpush1.msra.mxu0 0.0
          %1671 = vmatprep.subr.mxu0 0.0
          %1672 = vmatpush1.msra.mxu0 0.0
          %1673 = vmatprep.subr.mxu0 0.0
          %1674 = vmatpush1.msra.mxu0 0.0
          %1675 = vmatprep.subr.mxu0 0.0
          %1676 = vmatpush1.msra.mxu0 0.0
          %1677 = vmatprep.subr.mxu0 0.0
          %1678 = vmatpush1.msra.mxu0 0.0
          %1679 = vmatprep.subr.mxu0 0.0
          %1680 = vmatpush1.msra.mxu0 0.0
          %1681 = vmatprep.mubr.f32.mxu0 0.0
          %1682 = vmatmul.mubr.f32.gmra.mrb[0].mxu0 %v1615
          %v1683 = vpop.f32.mrb[0].mxu0
          %v1684 = vadd.f32 0.0, %v1683
          %v1685 = vpop.f32.mrb[0].mxu0
          %v1686 = vadd.f32 0.0, %v1685
          %1687 = vdwg.mxu0
          %v1690 = vcombine.low %v1684, %v1686
          %v1692 = vunpack.c.l.s4 1966171168
          %v1693 = vunpack.c.0.s8 %v1692
          %v1694 = vlaneseq
          %v1695 = vshrl.u32 %v1694, 7
          %v1696 = vsub.s32 %v1693, %v1695
          %v1697 = vrot.slane %v1690, %v1696
          %v1699 = vunpack.c.l.s4 1966171168
          %v1700 = vunpack.c.0.s8 %v1699
          %v1701 = vlaneseq
          %v1702 = vshrl.u32 %v1701, 7
          %v1703 = vsub.s32 %v1700, %v1702
          %v1704 = vrot.slane %v1697, %v1703
          %v1706 = vlaneseq
          %vm1707 = vcmp.ge.s32.totalorder %v1706, 0
          %vm1708 = vcmp.lt.s32.totalorder %v1706, 256
          %vm1709 = vmand %vm1707, %vm1708
          %1710 = vst.msk [vmem:[#allocation5] sm:$0x3] %vm1709, %v1704
          %v1711 = vld [vmem:[%s5] sm:$0xff]
          %v1712 = vld [vmem:[%s5 + $0x8] sm:$0xff]
          %v1714 = vsel %vm1613, %v1610, 0
          %1716 = vmatprep.subr.mxu0 %v1712
          %1717 = vmatpush1.msra.mxu0 %v1711
          %1718 = vmatprep.subr.mxu0 0.0
          %1719 = vmatpush1.msra.mxu0 0.0
          %1720 = vmatprep.subr.mxu0 0.0
          %1721 = vmatpush1.msra.mxu0 0.0
          %1722 = vmatprep.subr.mxu0 0.0
          %1723 = vmatpush1.msra.mxu0 0.0
          %1724 = vmatprep.subr.mxu0 0.0
          %1725 = vmatpush1.msra.mxu0 0.0
          %1726 = vmatprep.subr.mxu0 0.0
          %1727 = vmatpush1.msra.mxu0 0.0
          %1728 = vmatprep.subr.mxu0 0.0
          %1729 = vmatpush1.msra.mxu0 0.0
          %1730 = vmatprep.subr.mxu0 0.0
          %1731 = vmatpush1.msra.mxu0 0.0
          %1732 = vmatprep.subr.mxu0 0.0
          %1733 = vmatpush1.msra.mxu0 0.0
          %1734 = vmatprep.subr.mxu0 0.0
          %1735 = vmatpush1.msra.mxu0 0.0
          %1736 = vmatprep.subr.mxu0 0.0
          %1737 = vmatpush1.msra.mxu0 0.0
          %1738 = vmatprep.subr.mxu0 0.0
          %1739 = vmatpush1.msra.mxu0 0.0
          %1740 = vmatprep.subr.mxu0 0.0
          %1741 = vmatpush1.msra.mxu0 0.0
          %1742 = vmatprep.subr.mxu0 0.0
          %1743 = vmatpush1.msra.mxu0 0.0
          %1744 = vmatprep.subr.mxu0 0.0
          %1745 = vmatpush1.msra.mxu0 0.0
          %1746 = vmatprep.subr.mxu0 0.0
          %1747 = vmatpush1.msra.mxu0 0.0
          %1748 = vmatprep.subr.mxu0 0.0
          %1749 = vmatpush1.msra.mxu0 0.0
          %1750 = vmatprep.subr.mxu0 0.0
          %1751 = vmatpush1.msra.mxu0 0.0
          %1752 = vmatprep.subr.mxu0 0.0
          %1753 = vmatpush1.msra.mxu0 0.0
          %1754 = vmatprep.subr.mxu0 0.0
          %1755 = vmatpush1.msra.mxu0 0.0
          %1756 = vmatprep.subr.mxu0 0.0
          %1757 = vmatpush1.msra.mxu0 0.0
          %1758 = vmatprep.subr.mxu0 0.0
          %1759 = vmatpush1.msra.mxu0 0.0
          %1760 = vmatprep.subr.mxu0 0.0
          %1761 = vmatpush1.msra.mxu0 0.0
          %1762 = vmatprep.subr.mxu0 0.0
          %1763 = vmatpush1.msra.mxu0 0.0
          %1764 = vmatprep.subr.mxu0 0.0
          %1765 = vmatpush1.msra.mxu0 0.0
          %1766 = vmatprep.subr.mxu0 0.0
          %1767 = vmatpush1.msra.mxu0 0.0
          %1768 = vmatprep.subr.mxu0 0.0
          %1769 = vmatpush1.msra.mxu0 0.0
          %1770 = vmatprep.subr.mxu0 0.0
          %1771 = vmatpush1.msra.mxu0 0.0
          %1772 = vmatprep.subr.mxu0 0.0
          %1773 = vmatpush1.msra.mxu0 0.0
          %1774 = vmatprep.subr.mxu0 0.0
          %1775 = vmatpush1.msra.mxu0 0.0
          %1776 = vmatprep.subr.mxu0 0.0
          %1777 = vmatpush1.msra.mxu0 0.0
          %1778 = vmatprep.subr.mxu0 0.0
          %1779 = vmatpush1.msra.mxu0 0.0
          %1780 = vmatprep.mubr.f32.mxu0 0.0
          %1781 = vmatmul.mubr.f32.gmra.mrb[0].mxu0 %v1714
          %v1782 = vpop.f32.mrb[0].mxu0
          %v1783 = vadd.f32 0.0, %v1782
          %v1784 = vpop.f32.mrb[0].mxu0
          %v1785 = vadd.f32 0.0, %v1784
          %1786 = vdwg.mxu0
          %v1789 = vcombine.low %v1783, %v1785
          %v1791 = vunpack.c.l.s4 1966171168
          %v1792 = vunpack.c.0.s8 %v1791
          %v1793 = vlaneseq
          %v1794 = vshrl.u32 %v1793, 7
          %v1795 = vsub.s32 %v1792, %v1794
          %v1796 = vrot.slane %v1789, %v1795
          %v1798 = vunpack.c.l.s4 1966171168
          %v1799 = vunpack.c.0.s8 %v1798
          %v1800 = vlaneseq
          %v1801 = vshrl.u32 %v1800, 7
          %v1802 = vsub.s32 %v1799, %v1801
          %v1803 = vrot.slane %v1796, %v1802
          %1805 = vst.msk [vmem:[#allocation6] sm:$0x3] %vm1709, %v1803
        $region68: #{tpu_custom_call.1} parent=51 // pred_fallthru
          _
        // Predicated region
        $region69: #{tpu_custom_call.1} parent=51 // pred_check
          %p1806 = pneg %p1399
        $region70: #{tpu_custom_call.1} parent=51 // pred_check_branch
          %1808 = sbr.rel (%p1806) target = $region72
        $region71: #{tpu_custom_call.1} parent=51 // pred_region
          %s1809 = smul.u32 %s28, 64
          %s1810 = sshra.s32 %s1809, 3
          %s1811 = sand.u32 %s1809, 7
          %s1812 = smul.u32 %s1810, 2
          %s1813 = smul.addr %s1812, 8
          %s1814 = scalar_lea.vmem [#allocation2], %s1813
          %v1815 = vld [vmem:[%s1814] sm:$0xff]
          %v1816 = vld [vmem:[%s1814 + $0x8] sm:$0xff]
          %v1817 = vld [vmem:[%s1814 + $0x10] sm:$0xff]
          %v1818 = vld [vmem:[%s1814 + $0x18] sm:$0xff]
          %v1819 = vld [vmem:[%s1814 + $0x20] sm:$0xff]
          %v1820 = vld [vmem:[%s1814 + $0x28] sm:$0xff]
          %v1821 = vld [vmem:[%s1814 + $0x30] sm:$0xff]
          %v1822 = vld [vmem:[%s1814 + $0x38] sm:$0xff]
          %v1823 = vld [vmem:[%s1814 + $0x40] sm:$0xff]
          %v1824 = vld [vmem:[%s1814 + $0x48] sm:$0xff]
          %v1825 = vld [vmem:[%s1814 + $0x50] sm:$0xff]
          %v1826 = vld [vmem:[%s1814 + $0x58] sm:$0xff]
          %v1827 = vld [vmem:[%s1814 + $0x60] sm:$0xff]
          %v1828 = vld [vmem:[%s1814 + $0x68] sm:$0xff]
          %v1829 = vld [vmem:[%s1814 + $0x70] sm:$0xff]
          %v1830 = vld [vmem:[%s1814 + $0x78] sm:$0xff]
          %v1831 = vld [vmem:[#allocation5] sm:$0x3]
          %v1833 = vlaneseq
          %v1834 = vshrl.u32 %v1833, 7
          %v1835 = vsub.s32 0, %v1834
          %v1836 = vrot.slane %v1831, %v1835
          %v1837 = vlaneseq
          %v1838 = vshrl.u32 %v1837, 7
          %v1839 = vsub.s32 1, %v1838
          %v1840 = vrot.slane %v1831, %v1839
          %v1843 = vmul.f32 %v1815, %v1836
          %v1844 = vmul.f32 %v1816, %v1840
          %v1845 = vmul.f32 %v1817, %v1836
          %v1846 = vmul.f32 %v1818, %v1840
          %v1847 = vmul.f32 %v1819, %v1836
          %v1848 = vmul.f32 %v1820, %v1840
          %v1849 = vmul.f32 %v1821, %v1836
          %v1850 = vmul.f32 %v1822, %v1840
          %v1851 = vmul.f32 %v1823, %v1836
          %v1852 = vmul.f32 %v1824, %v1840
          %v1853 = vmul.f32 %v1825, %v1836
          %v1854 = vmul.f32 %v1826, %v1840
          %v1855 = vmul.f32 %v1827, %v1836
          %v1856 = vmul.f32 %v1828, %v1840
          %v1857 = vmul.f32 %v1829, %v1836
          %v1858 = vmul.f32 %v1830, %v1840
          %v1859 = vld [vmem:[#allocation6] sm:$0x3]
          %v1861 = vlaneseq
          %v1862 = vshrl.u32 %v1861, 7
          %v1863 = vsub.s32 0, %v1862
          %v1864 = vrot.slane %v1859, %v1863
          %v1865 = vlaneseq
          %v1866 = vshrl.u32 %v1865, 7
          %v1867 = vsub.s32 1, %v1866
          %v1868 = vrot.slane %v1859, %v1867
          %v1871 = vadd.f32 %v1843, %v1864
          %v1872 = vadd.f32 %v1844, %v1868
          %v1873 = vadd.f32 %v1845, %v1864
          %v1874 = vadd.f32 %v1846, %v1868
          %v1875 = vadd.f32 %v1847, %v1864
          %v1876 = vadd.f32 %v1848, %v1868
          %v1877 = vadd.f32 %v1849, %v1864
          %v1878 = vadd.f32 %v1850, %v1868
          %v1879 = vadd.f32 %v1851, %v1864
          %v1880 = vadd.f32 %v1852, %v1868
          %v1881 = vadd.f32 %v1853, %v1864
          %v1882 = vadd.f32 %v1854, %v1868
          %v1883 = vadd.f32 %v1855, %v1864
          %v1884 = vadd.f32 %v1856, %v1868
          %v1885 = vadd.f32 %v1857, %v1864
          %v1886 = vadd.f32 %v1858, %v1868
          %v1887 = vmax.f32 %v1871, 0.0
          %v1888 = vmax.f32 %v1872, 0.0
          %v1889 = vmax.f32 %v1873, 0.0
          %v1890 = vmax.f32 %v1874, 0.0
          %v1891 = vmax.f32 %v1875, 0.0
          %v1892 = vmax.f32 %v1876, 0.0
          %v1893 = vmax.f32 %v1877, 0.0
          %v1894 = vmax.f32 %v1878, 0.0
          %v1895 = vmax.f32 %v1879, 0.0
          %v1896 = vmax.f32 %v1880, 0.0
          %v1897 = vmax.f32 %v1881, 0.0
          %v1898 = vmax.f32 %v1882, 0.0
          %v1899 = vmax.f32 %v1883, 0.0
          %v1900 = vmax.f32 %v1884, 0.0
          %v1901 = vmax.f32 %v1885, 0.0
          %v1902 = vmax.f32 %v1886, 0.0
          %1903 = vst [vmem:[%s338] sm:$0xff] %v1887
          %1904 = vst [vmem:[%s338 + $0x8] sm:$0xff] %v1888
          %1905 = vst [vmem:[%s338 + $0x10] sm:$0xff] %v1889
          %1906 = vst [vmem:[%s338 + $0x18] sm:$0xff] %v1890
          %1907 = vst [vmem:[%s338 + $0x20] sm:$0xff] %v1891
          %1908 = vst [vmem:[%s338 + $0x28] sm:$0xff] %v1892
          %1909 = vst [vmem:[%s338 + $0x30] sm:$0xff] %v1893
          %1910 = vst [vmem:[%s338 + $0x38] sm:$0xff] %v1894
          %1911 = vst [vmem:[%s338 + $0x40] sm:$0xff] %v1895
          %1912 = vst [vmem:[%s338 + $0x48] sm:$0xff] %v1896
          %1913 = vst [vmem:[%s338 + $0x50] sm:$0xff] %v1897
          %1914 = vst [vmem:[%s338 + $0x58] sm:$0xff] %v1898
          %1915 = vst [vmem:[%s338 + $0x60] sm:$0xff] %v1899
          %1916 = vst [vmem:[%s338 + $0x68] sm:$0xff] %v1900
          %1917 = vst [vmem:[%s338 + $0x70] sm:$0xff] %v1901
          %1918 = vst [vmem:[%s338 + $0x78] sm:$0xff] %v1902
        $region72: #{tpu_custom_call.1} parent=51 // pred_fallthru
          _
        %s1919 = sand.u32 %s222, 1
        %s1920 = scalar_lea.sflag [#allocation9], %s1919
        %s1921 = sand.u32 %s222, 1
        %s1922 = smul.addr %s1921, 128
        %s1923 = scalar_lea.vmem [#allocation10], %s1922
        // Predicated region
        $region73: #{tpu_custom_call.1} parent=51 // pred_check
          %p1924 = pneg %p232
        $region74: #{tpu_custom_call.1} parent=51 // pred_check_branch
          %1926 = sbr.rel (%p1924) target = $region76
        $region75: #{tpu_custom_call.1} parent=51 // pred_region
          %s1927 = smul.u32 %s28, %s27
          %s1928 = smul.u32 8, %s1927
          %s1930 = ssub.s32 2048, 2048
          %1931 = vsyncadd %s1920, %s1930
          %s1932 = smul.addr %s1928, 2
          %s1933 = smul.addr %s1932, 128
          %s1934 = scalar_lea.hbm %s8, %s1933
          %s1935 = sshll.u32 %s1923, 4
          %s1936 = int_to_ptr.vmem [resolvable:$true] %s1935
          %1941 = dma.vmem_to_hbm [thread:$0]  %s1936, 2048, %s1934, %s1920, 256, 256, 16
        $region76: #{tpu_custom_call.1} parent=51 // pred_fallthru
          _
      $region52: #{tpu_custom_call.1} parent=5 // pred_fallthru
        _
      %p1942 = scmp.le.s32.totalorder 2, %s18
      // Predicated region
      $region77: #{tpu_custom_call.1} parent=5 // pred_check
        %p1943 = pneg %p1942
      $region78: #{tpu_custom_call.1} parent=5 // pred_check_branch
        %1945 = sbr.rel (%p1943) target = $region80
      $region79: #{tpu_custom_call.1} parent=5 // pred_region
        %s1946 = ssub.s32 %s18, 2
        // Predicated region
        $region81: #{tpu_custom_call.1} parent=79 // pred_check
          %p1947 = pneg %p238
        $region82: #{tpu_custom_call.1} parent=79 // pred_check_branch
          %1949 = sbr.rel (%p1947) target = $region84
        $region83: #{tpu_custom_call.1} parent=79 // pred_region
          %s1950 = sand.u32 %s223, 1
          %s1951 = scalar_lea.sflag [#allocation9], %s1950
          %s1952 = sand.u32 %s223, 1
          %s1953 = smul.addr %s1952, 128
          %s1954 = scalar_lea.vmem [#allocation10], %s1953
          %1955 = dma.done %s1951, 2048
        $region84: #{tpu_custom_call.1} parent=79 // pred_fallthru
          _
      $region80: #{tpu_custom_call.1} parent=5 // pred_fallthru
        _
    $region6: #{tpu_custom_call.1} parent=1 // loop_footer
      %s22 = sadd.s32 1, %s18
    $region7: #{tpu_custom_call.1} parent=1 // loop_footer_branch
      %17 = sbr.rel target = $region3
    $region8: #{tpu_custom_call.1} parent=1 // loop_exit
      _
    %1956 = vsyncpa [#allocation8], 1
    %s1957 = scalar_lea.sflag [#allocation8], 1
    %1958 = vsyncpa %s1957, 1
    %1959 = vsyncpa [#allocation9], 1
    %s1960 = scalar_lea.sflag [#allocation9], 1
    %1961 = vsyncpa %s1960, 1

</llo_original>
